<compile_context>
chip_gen: v7x
topology: tpu7x:2x2x1
jax: 0.10.0
libtpu: 0.0.40
codegen_flags: <defaults>
</compile_context>

<pallas_src>
import jax
import jax.numpy as jnp
from jax.experimental import pallas as pl
from jax.experimental.pallas import tpu as pltpu

# The PyTorch forward divides the attention logits by a hard-coded 10368
# (= 18*24*24), independent of the actual spatial size.  We keep that.
ATTN_DIV = 10368.0


# --------------------------------------------------------------------------
# Fused kernel:  per (query-tile i, key-tile j):
#   j == 0 :   fi_sc   = Xq @ Wi + bi           (1x1x1 conv "i", f32)
#              acc_sc  = 0
#   every j:   fj      = Xk @ Wj + bj           (1x1x1 conv "j", f32)
#              S       = (fi_sc @ fj^T) / 10368  (bf16 MXU, f32 acc)
#              acc_sc += S @ Xk                  (bf16 MXU, f32 acc)
#   j == last: out     = Xq + acc_sc             (residual, f32)
# --------------------------------------------------------------------------
def _non_local_kernel(xq_ref, xk_ref, wi_ref, bi_ref, wj_ref, bj_ref,
                      o_ref, fi_sc, acc_sc):
    j = pl.program_id(1)

    @pl.when(j == 0)
    def _init():
        fi_sc[...] = (jnp.dot(xq_ref[...], wi_ref[...],
                              preferred_element_type=jnp.float32)
                      + bi_ref[...])
        acc_sc[...] = jnp.zeros_like(acc_sc)

    # projection "j" for this key tile (recomputed per query tile: tiny matmul,
    # cheaper than writing/reading fj through HBM).
    fj = (jnp.dot(xk_ref[...], wj_ref[...],
                  preferred_element_type=jnp.float32)
          + bj_ref[...])

    # scores tile: (tq, C/2) x (tk, C/2)^T -> (tq, tk), scaled like the ref.
    s = jax.lax.dot_general(
        fi_sc[...].astype(jnp.bfloat16), fj.astype(jnp.bfloat16),
        dimension_numbers=(((1,), (1,)), ((), ())),
        preferred_element_type=jnp.float32) * (1.0 / ATTN_DIV)

    # attention @ features for this key tile.
    acc_sc[...] += jnp.dot(s.astype(jnp.bfloat16),
                           xk_ref[...].astype(jnp.bfloat16),
                           preferred_element_type=jnp.float32)

    @pl.when(j == pl.num_programs(1) - 1)
    def _finalize():
        o_ref[...] = xq_ref[...] + acc_sc[...]


def _round_up(a, b):
    return (a + b - 1) // b * b


# --------------------------------------------------------------------------
# Wrapper: layout plumbing (NCDHW <-> flat spatial-major (M, C)), padding,
# BlockSpecs / grid.
# --------------------------------------------------------------------------
def non_local_b_forward(features, params, *, tile=256):
    """features: (1, C, D, H, W) float32 (batch must be 1, as the PyTorch
    forward relies on .squeeze())."""
    n, c, d, h, w = features.shape
    assert n == 1, "non_local_b.forward assumes batch size 1 (uses .squeeze())"
    assert c % 2 == 0
    ch = c // 2
    m = d * h * w

    # (1, C, D, H, W) -> (M, C), spatial index in D,H,W row-major order
    # (matches permute(1,2,3,0).view(-1, c) in the PyTorch code).
    x = jnp.transpose(features[0], (1, 2, 3, 0)).reshape(m, c)

    mp = _round_up(m, tile)
    x_pad = jnp.pad(x, ((0, mp - m), (0, 0))) if mp != m else x

    # Conv3d 1x1x1 weights (C/2, C, 1, 1, 1) -> matmul form (C, C/2).
    wi_mat = params["wi"].reshape(ch, c).T
    wj_mat = params["wj"].reshape(ch, c).T
    bi2 = params["bi"].reshape(1, ch)
    bj2 = params["bj"].reshape(1, ch)

    grid = (mp // tile, mp // tile)

    out = pl.pallas_call(
        _non_local_kernel,
        out_shape=jax.ShapeDtypeStruct((mp, c), jnp.float32),
        grid_spec=pltpu.PrefetchScalarGridSpec(
            num_scalar_prefetch=0,
            grid=grid,
            in_specs=[
                pl.BlockSpec((tile, c), lambda i, j: (i, 0)),   # Xq (query tile)
                pl.BlockSpec((tile, c), lambda i, j: (j, 0)),   # Xk (key tile)
                pl.BlockSpec((c, ch), lambda i, j: (0, 0)),     # Wi (resident)
                pl.BlockSpec((1, ch), lambda i, j: (0, 0)),     # bi
                pl.BlockSpec((c, ch), lambda i, j: (0, 0)),     # Wj (resident)
                pl.BlockSpec((1, ch), lambda i, j: (0, 0)),     # bj
            ],
            out_specs=pl.BlockSpec((tile, c), lambda i, j: (i, 0)),
            scratch_shapes=[
                pltpu.VMEM((tile, ch), jnp.float32),            # fi tile
                pltpu.VMEM((tile, c), jnp.float32),             # f32 accumulator
            ],
        ),
        compiler_params=pltpu.CompilerParams(
            dimension_semantics=("parallel", "arbitrary")),
    )(x_pad, x_pad, wi_mat, bi2, wj_mat, bj2)

    out = out[:m]                                              # drop padded query rows
    # (M, C) -> (C, D, H, W) -> (1, C, D, H, W)   (matches permute(1,0).view(size))
    return jnp.transpose(out.reshape(d, h, w, c), (3, 0, 1, 2))[None]


# --------------------------------------------------------------------------
# Pure-JAX reference (mirrors the PyTorch forward exactly) for validation.
# --------------------------------------------------------------------------
def non_local_b_reference(features, params):
    n, c, d, h, w = features.shape
    m = d * h * w
    x = jnp.transpose(features[0], (1, 2, 3, 0)).reshape(m, c)
    fi = x @ params["wi"].reshape(c // 2, c).T + params["bi"]
    fj = x @ params["wj"].reshape(c // 2, c).T + params["bj"]
    att = (fi @ fj.T) / ATTN_DIV
    out = x + att @ x
    return jnp.transpose(out.reshape(d, h, w, c), (3, 0, 1, 2))[None]


def init_params(key, c):
    ch = c // 2
    kwi, kbi, kwj, kbj = jax.random.split(key, 4)
    bound = 1.0 / float(c) ** 0.5            # PyTorch Conv3d default init (fan_in = C)
    wi = jax.random.uniform(kwi, (ch, c), jnp.float32, -bound, bound)
    bi = jax.random.uniform(kbi, (ch,), jnp.float32, -bound, bound)
    wj = jax.random.uniform(kwj, (ch, c), jnp.float32, -bound, bound)
    bj = jax.random.uniform(kbj, (ch,), jnp.float32, -bound, bound)
    return dict(wi=wi, bi=bi, wj=wj, bj=bj)


if __name__ == "__main__":
    key = jax.random.PRNGKey(0)
    kx, kp = jax.random.split(key)

    # Small shapes consistent with the module: batch=1 (forward uses .squeeze()),
    # feature_size C=32 (so C//2 = 16), spatial grid 6x8x8 -> M = 384 tokens
    # (exercises the M-padding path with tile=256).
    C, D, H, W = 32, 6, 8, 8
    features = jax.random.normal(kx, (1, C, D, H, W), jnp.float32)
    params = init_params(kp, C)

    y = jax.jit(non_local_b_forward)(features, params)
    y = jax.block_until_ready(y)

    assert y.shape == features.shape, y.shape
    assert bool(jnp.all(jnp.isfinite(y)))

    # correctness vs pure-JAX reference (bf16 MXU inputs -> loose-ish tolerance)
    y_ref = non_local_b_reference(features, params)
    max_err = float(jnp.max(jnp.abs(y - y_ref)))
    assert max_err < 1e-2, f"max abs error {max_err}"

    print("KERNEL_OK")
</pallas_src>

<mosaic_0001>
module attributes {stable_mosaic.version = 11 : i64} {
  func.func @_non_local_kernel(%arg0: i32, %arg1: i32, %arg2: memref<256x32xf32, #tpu.memory_space<vmem>>, %arg3: memref<256x32xf32, #tpu.memory_space<vmem>>, %arg4: memref<32x16xf32, #tpu.memory_space<vmem>>, %arg5: memref<1x16xf32, #tpu.memory_space<vmem>>, %arg6: memref<32x16xf32, #tpu.memory_space<vmem>>, %arg7: memref<1x16xf32, #tpu.memory_space<vmem>>, %arg8: memref<256x32xf32, #tpu.memory_space<vmem>>, %arg9: memref<256x16xf32, #tpu.memory_space<vmem>>, %arg10: memref<256x32xf32, #tpu.memory_space<vmem>>) attributes {dimension_semantics = [#tpu.dimension_semantics<parallel>, #tpu.dimension_semantics<arbitrary>], iteration_bounds = array<i64: 2, 2>, scalar_prefetch = 0 : i64, scratch_operands = 2 : i64, tpu.core_type = #tpu.core_type<tc>, window_params = [{transform_indices = @transform_0, window_bounds = array<i64: 256, 32>}, {transform_indices = @transform_1, window_bounds = array<i64: 256, 32>}, {pipeline_mode = #tpu.pipeline_mode<synchronous>, transform_indices = @transform_2, window_bounds = array<i64: 32, 16>}, {pipeline_mode = #tpu.pipeline_mode<synchronous>, transform_indices = @transform_3, window_bounds = array<i64: 1, 16>}, {pipeline_mode = #tpu.pipeline_mode<synchronous>, transform_indices = @transform_4, window_bounds = array<i64: 32, 16>}, {pipeline_mode = #tpu.pipeline_mode<synchronous>, transform_indices = @transform_5, window_bounds = array<i64: 1, 16>}, {transform_indices = @transform_6, window_bounds = array<i64: 256, 32>}]} {
    %c0_i32 = arith.constant 0 : i32
    %0 = arith.cmpi eq, %arg1, %c0_i32 : i32
    %1 = arith.extui %0 : i1 to i32
    %c0_i32_0 = arith.constant 0 : i32
    %2 = arith.cmpi ne, %1, %c0_i32_0 : i32
    scf.if %2 {
      %c0_18 = arith.constant 0 : index
      %c0_19 = arith.constant 0 : index
      %25 = vector.load %arg2[%c0_18, %c0_19] : memref<256x32xf32, #tpu.memory_space<vmem>>, vector<256x32xf32>
      %c0_20 = arith.constant 0 : index
      %c0_21 = arith.constant 0 : index
      %26 = vector.load %arg4[%c0_20, %c0_21] : memref<32x16xf32, #tpu.memory_space<vmem>>, vector<32x16xf32>
      %cst_22 = arith.constant dense<0.000000e+00> : vector<256x16xf32>
      %27 = tpu.matmul %25, %26, %cst_22 {dimension_numbers = #tpu.dot_dimension_numbers<[1], [0], [0], [1], [0, 0, 1, 1], [], []>} : vector<256x32xf32>, vector<32x16xf32>, vector<256x16xf32> -> vector<256x16xf32>
      %c0_23 = arith.constant 0 : index
      %c0_24 = arith.constant 0 : index
      %28 = vector.load %arg5[%c0_23, %c0_24] : memref<1x16xf32, #tpu.memory_space<vmem>>, vector<1x16xf32>
      %29 = vector.broadcast %28 : vector<1x16xf32> to vector<256x16xf32>
      %30 = arith.addf %27, %29 : vector<256x16xf32>
      %c0_25 = arith.constant 0 : index
      %c0_26 = arith.constant 0 : index
      %31 = vector.load %arg9[%c0_25, %c0_26] : memref<256x16xf32, #tpu.memory_space<vmem>>, vector<256x16xf32>
      tpu.vector_store %arg9[%c0_25, %c0_26], %30 {strides = array<i32>} : memref<256x16xf32, #tpu.memory_space<vmem>>, vector<256x16xf32>,
      %cst_27 = arith.constant 0.000000e+00 : f32
      %32 = vector.broadcast %cst_27 : f32 to vector<256x32xf32>
      %c0_28 = arith.constant 0 : index
      %c0_29 = arith.constant 0 : index
      %33 = vector.load %arg10[%c0_28, %c0_29] : memref<256x32xf32, #tpu.memory_space<vmem>>, vector<256x32xf32>
      tpu.vector_store %arg10[%c0_28, %c0_29], %32 {strides = array<i32>} : memref<256x32xf32, #tpu.memory_space<vmem>>, vector<256x32xf32>,
    } else {
    }
    %c0 = arith.constant 0 : index
    %c0_1 = arith.constant 0 : index
    %3 = vector.load %arg3[%c0, %c0_1] : memref<256x32xf32, #tpu.memory_space<vmem>>, vector<256x32xf32>
    %c0_2 = arith.constant 0 : index
    %c0_3 = arith.constant 0 : index
    %4 = vector.load %arg6[%c0_2, %c0_3] : memref<32x16xf32, #tpu.memory_space<vmem>>, vector<32x16xf32>
    %cst = arith.constant dense<0.000000e+00> : vector<256x16xf32>
    %5 = tpu.matmul %3, %4, %cst {dimension_numbers = #tpu.dot_dimension_numbers<[1], [0], [0], [1], [0, 0, 1, 1], [], []>} : vector<256x32xf32>, vector<32x16xf32>, vector<256x16xf32> -> vector<256x16xf32>
    %c0_4 = arith.constant 0 : index
    %c0_5 = arith.constant 0 : index
    %6 = vector.load %arg7[%c0_4, %c0_5] : memref<1x16xf32, #tpu.memory_space<vmem>>, vector<1x16xf32>
    %7 = vector.broadcast %6 : vector<1x16xf32> to vector<256x16xf32>
    %8 = arith.addf %5, %7 : vector<256x16xf32>
    %c0_6 = arith.constant 0 : index
    %c0_7 = arith.constant 0 : index
    %9 = vector.load %arg9[%c0_6, %c0_7] : memref<256x16xf32, #tpu.memory_space<vmem>>, vector<256x16xf32>
    %10 = arith.truncf %9 : vector<256x16xf32> to vector<256x16xbf16>
    %11 = arith.truncf %8 : vector<256x16xf32> to vector<256x16xbf16>
    %cst_8 = arith.constant dense<0.000000e+00> : vector<256x256xf32>
    %12 = tpu.matmul %10, %11, %cst_8 {dimension_numbers = #tpu.dot_dimension_numbers<[1], [1], [0], [0], [0, 0, 1, 0], [], []>} : vector<256x16xbf16>, vector<256x16xbf16>, vector<256x256xf32> -> vector<256x256xf32>
    %cst_9 = arith.constant 9.6450618E-5 : f32
    %13 = vector.broadcast %cst_9 : f32 to vector<256x256xf32>
    %14 = arith.mulf %12, %13 : vector<256x256xf32>
    %c0_10 = arith.constant 0 : index
    %c0_11 = arith.constant 0 : index
    %15 = vector.load %arg10[%c0_10, %c0_11] : memref<256x32xf32, #tpu.memory_space<vmem>>, vector<256x32xf32>
    %16 = arith.truncf %14 : vector<256x256xf32> to vector<256x256xbf16>
    %c0_12 = arith.constant 0 : index
    %c0_13 = arith.constant 0 : index
    %17 = vector.load %arg3[%c0_12, %c0_13] : memref<256x32xf32, #tpu.memory_space<vmem>>, vector<256x32xf32>
    %18 = arith.truncf %17 : vector<256x32xf32> to vector<256x32xbf16>
    %cst_14 = arith.constant dense<0.000000e+00> : vector<256x32xf32>
    %19 = tpu.matmul %16, %18, %cst_14 {dimension_numbers = #tpu.dot_dimension_numbers<[1], [0], [0], [1], [0, 0, 1, 1], [], []>} : vector<256x256xbf16>, vector<256x32xbf16>, vector<256x32xf32> -> vector<256x32xf32>
    %20 = arith.addf %15, %19 : vector<256x32xf32>
    %c0_15 = arith.constant 0 : index
    %c0_16 = arith.constant 0 : index
    %21 = vector.load %arg10[%c0_15, %c0_16] : memref<256x32xf32, #tpu.memory_space<vmem>>, vector<256x32xf32>
    tpu.vector_store %arg10[%c0_15, %c0_16], %20 {strides = array<i32>} : memref<256x32xf32, #tpu.memory_space<vmem>>, vector<256x32xf32>,
    %c1_i32 = arith.constant 1 : i32
    %22 = arith.cmpi eq, %arg1, %c1_i32 : i32
    %23 = arith.extui %22 : i1 to i32
    %c0_i32_17 = arith.constant 0 : i32
    %24 = arith.cmpi ne, %23, %c0_i32_17 : i32
    scf.if %24 {
      %c0_18 = arith.constant 0 : index
      %c0_19 = arith.constant 0 : index
      %25 = vector.load %arg2[%c0_18, %c0_19] : memref<256x32xf32, #tpu.memory_space<vmem>>, vector<256x32xf32>
      %c0_20 = arith.constant 0 : index
      %c0_21 = arith.constant 0 : index
      %26 = vector.load %arg10[%c0_20, %c0_21] : memref<256x32xf32, #tpu.memory_space<vmem>>, vector<256x32xf32>
      %27 = arith.addf %25, %26 : vector<256x32xf32>
      %c0_22 = arith.constant 0 : index
      %c0_23 = arith.constant 0 : index
      %28 = vector.load %arg8[%c0_22, %c0_23] : memref<256x32xf32, #tpu.memory_space<vmem>>, vector<256x32xf32>
      tpu.vector_store %arg8[%c0_22, %c0_23], %27 {strides = array<i32>} : memref<256x32xf32, #tpu.memory_space<vmem>>, vector<256x32xf32>,
    } else {
    }
    return
  }
  func.func @transform_0(%arg0: i32, %arg1: i32) -> (i32, i32) {
    %c0_i32 = arith.constant 0 : i32
    %c0_i32_0 = arith.constant 0 : i32
    return %arg0, %c0_i32 : i32, i32
  }
  func.func @transform_1(%arg0: i32, %arg1: i32) -> (i32, i32) {
    %c0_i32 = arith.constant 0 : i32
    %c0_i32_0 = arith.constant 0 : i32
    return %arg1, %c0_i32 : i32, i32
  }
  func.func @transform_2(%arg0: i32, %arg1: i32) -> (i32, i32) {
    %c0_i32 = arith.constant 0 : i32
    %c0_i32_0 = arith.constant 0 : i32
    %c0_i32_1 = arith.constant 0 : i32
    return %c0_i32, %c0_i32_0 : i32, i32
  }
  func.func @transform_3(%arg0: i32, %arg1: i32) -> (i32, i32) {
    %c0_i32 = arith.constant 0 : i32
    %c0_i32_0 = arith.constant 0 : i32
    %c0_i32_1 = arith.constant 0 : i32
    return %c0_i32, %c0_i32_0 : i32, i32
  }
  func.func @transform_4(%arg0: i32, %arg1: i32) -> (i32, i32) {
    %c0_i32 = arith.constant 0 : i32
    %c0_i32_0 = arith.constant 0 : i32
    %c0_i32_1 = arith.constant 0 : i32
    return %c0_i32, %c0_i32_0 : i32, i32
  }
  func.func @transform_5(%arg0: i32, %arg1: i32) -> (i32, i32) {
    %c0_i32 = arith.constant 0 : i32
    %c0_i32_0 = arith.constant 0 : i32
    %c0_i32_1 = arith.constant 0 : i32
    return %c0_i32, %c0_i32_0 : i32, i32
  }
  func.func @transform_6(%arg0: i32, %arg1: i32) -> (i32, i32) {
    %c0_i32 = arith.constant 0 : i32
    %c0_i32_0 = arith.constant 0 : i32
    return %arg0, %c0_i32 : i32, i32
  }
}

</mosaic_0001>

<llo_original>
// kernel: non_local_b_forward.1
$region0: #{non_local_b_forward.1}
  #allocation0 [shape = 'u32[]', space=smem, size = 0x4, offset = 0x4, fixed_abs, tag = 'smem constant byte address 0x4 - core index']
  #allocation1 [shape = 'u32[144,128]{1,0:T(1,128)}', space=vmem, size = 0x12000, scoped, tag = 'internal scratch']
  #allocation2 [shape = 'f32[256,16]{1,0:T(8,128)}', space=vmem, size = 0x20000, scoped, tag = 'scratch operand']
  #allocation3 [shape = 'f32[256,32]{1,0:T(8,128)}', space=vmem, size = 0x20000, scoped, tag = 'scratch operand']
  %s0 = inlined_call_operand.vmem [shape: f32[512,32], index: 0, kind: input, shape index: {}, may-alias: {0,1}]
  %s1 = inlined_call_operand.vmem [shape: f32[512,32], index: 1, kind: input, shape index: {}, may-alias: {0,1}]
  %s2 = inlined_call_operand.vmem [shape: f32[32,16], index: 2, kind: input, shape index: {}]
  %s3 = inlined_call_operand.vmem [shape: f32[1,16], index: 3, kind: input, shape index: {}]
  %s4 = inlined_call_operand.vmem [shape: f32[32,16], index: 4, kind: input, shape index: {}]
  %s5 = inlined_call_operand.vmem [shape: f32[1,16], index: 5, kind: input, shape index: {}]
  %s6 = inlined_call_operand.vmem [shape: f32[512,32], index: 6, kind: output, shape index: {}]
  %s7 = sld [smem:[#allocation0]]
  $region65: #{non_local_b_forward.1} parent=0
    _
  %s9 = ssub.s32 1, %s7
  %s10 = scalar_select 0, %s9, %s7
  loop: start=0, step=1, limit=6
  $region2: #{non_local_b_forward.1} parent=0 // loop_pre_header
    _
  $region3: #{non_local_b_forward.1} parent=0 // loop_header
    %s12 = sphi 0, %s16
    %p13 = scmp.ge.s32.totalorder %s12, 6
    %s19 = sphi 0, %s31
    %s20 = sphi 0, %s27
    %s21 = sphi 0, %s19
    %s22 = sphi 0, %s20
    %s23 = sphi 0, %s21
    %s24 = sphi 0, %s22
    %s34 = sphi 0, %s36
    %s37 = sphi 0, %s34
    %s38 = sphi 0, %s37
    %s54 = sphi 0, %s38
    %s60 = sphi 0, %s62
    %s63 = sphi 0, %s60
    %s64 = sphi 0, %s63
    %s80 = sphi 0, %s64
    %s84 = sphi 0, %s84
    %s86 = sphi 0, %s84
    %s87 = sphi 0, %s86
    %s101 = sphi 0, %s87
    %s105 = sphi 0, %s105
    %s107 = sphi 0, %s105
    %s108 = sphi 0, %s107
    %s122 = sphi 0, %s108
    %s126 = sphi 0, %s126
    %s128 = sphi 0, %s126
    %s129 = sphi 0, %s128
    %s143 = sphi 0, %s129
    %s147 = sphi 0, %s147
    %s149 = sphi 0, %s147
    %s150 = sphi 0, %s149
    %s164 = sphi 0, %s150
    %s170 = sphi 0, %s172
    %s173 = sphi 0, %s170
    %s174 = sphi 0, %s173
    %s190 = sphi 0, %s174
  $region4: #{non_local_b_forward.1} parent=0 // loop_header_branch
    %15 = sbr.rel (%p13) target = $region8
  $region5: #{non_local_b_forward.1} parent=0 // loop_body
    %s17 = ssub.s32 %s12, 1
    %s18 = ssub.s32 %s12, 2
    %s25 = sadd.s32 1, %s20
    %p26 = scmp.ge.s32.totalorder %s25, 2
    %s27 = scalar_select %p26, 0, %s25
    %s28 = sadd.s32 1, %s19
    %s29 = scalar_select %p26, %s28, %s19
    %p30 = scmp.ge.s32.totalorder %s29, 2
    %s31 = scalar_select %p30, 0, %s29
    %s32 = ssub.s32 %s19, %s31
    %p33 = scmp.eq.s32.totalorder %s32, 0
    %s35 = sadd.s32 %s34, 1
    %s36 = scalar_select %p33, %s34, %s35
    %p39 = pneg %p33
    %p40 = scmp.eq.s32.totalorder %s12, 3
    %p41 = por %p39, %p40
    %p42 = scmp.ne.s32.totalorder %s34, %s37
    %p43 = scmp.eq.s32.totalorder %s12, 0
    %p44 = por %p42, %p43
    %p45 = scmp.ne.s32.totalorder %s34, %s37
    %p46 = scmp.eq.s32.totalorder %s17, 3
    %p47 = por %p45, %p46
    %p48 = scmp.ne.s32.totalorder %s37, %s38
    %p49 = scmp.eq.s32.totalorder %s17, 0
    %p50 = por %p48, %p49
    %p51 = scmp.ne.s32.totalorder %s37, %s38
    %p52 = scmp.eq.s32.totalorder %s18, 3
    %p53 = por %p51, %p52
    %p55 = scmp.ne.s32.totalorder %s38, %s54
    %p56 = scmp.eq.s32.totalorder %s18, 0
    %p57 = por %p55, %p56
    %s58 = ssub.s32 %s20, %s27
    %p59 = scmp.eq.s32.totalorder %s58, 0
    %s61 = sadd.s32 %s60, 1
    %s62 = scalar_select %p59, %s60, %s61
    %p65 = pneg %p59
    %p66 = scmp.eq.s32.totalorder %s12, 3
    %p67 = por %p65, %p66
    %p68 = scmp.ne.s32.totalorder %s60, %s63
    %p69 = scmp.eq.s32.totalorder %s12, 0
    %p70 = por %p68, %p69
    %p71 = scmp.ne.s32.totalorder %s60, %s63
    %p72 = scmp.eq.s32.totalorder %s17, 3
    %p73 = por %p71, %p72
    %p74 = scmp.ne.s32.totalorder %s63, %s64
    %p75 = scmp.eq.s32.totalorder %s17, 0
    %p76 = por %p74, %p75
    %p77 = scmp.ne.s32.totalorder %s63, %s64
    %p78 = scmp.eq.s32.totalorder %s18, 3
    %p79 = por %p77, %p78
    %p81 = scmp.ne.s32.totalorder %s64, %s80
    %p82 = scmp.eq.s32.totalorder %s18, 0
    %p83 = por %p81, %p82
    %s85 = sadd.s32 %s84, 1
    %p88 = scmp.eq.s32.totalorder %s12, 3
    %p89 = scmp.ne.s32.totalorder %s84, %s86
    %p90 = scmp.eq.s32.totalorder %s12, 0
    %p91 = por %p89, %p90
    %p92 = scmp.ne.s32.totalorder %s84, %s86
    %p93 = scmp.eq.s32.totalorder %s17, 3
    %p94 = por %p92, %p93
    %p95 = scmp.ne.s32.totalorder %s86, %s87
    %p96 = scmp.eq.s32.totalorder %s17, 0
    %p97 = por %p95, %p96
    %p98 = scmp.ne.s32.totalorder %s86, %s87
    %p99 = scmp.eq.s32.totalorder %s18, 3
    %p100 = por %p98, %p99
    %p102 = scmp.ne.s32.totalorder %s87, %s101
    %p103 = scmp.eq.s32.totalorder %s18, 0
    %p104 = por %p102, %p103
    %s106 = sadd.s32 %s105, 1
    %p109 = scmp.eq.s32.totalorder %s12, 3
    %p110 = scmp.ne.s32.totalorder %s105, %s107
    %p111 = scmp.eq.s32.totalorder %s12, 0
    %p112 = por %p110, %p111
    %p113 = scmp.ne.s32.totalorder %s105, %s107
    %p114 = scmp.eq.s32.totalorder %s17, 3
    %p115 = por %p113, %p114
    %p116 = scmp.ne.s32.totalorder %s107, %s108
    %p117 = scmp.eq.s32.totalorder %s17, 0
    %p118 = por %p116, %p117
    %p119 = scmp.ne.s32.totalorder %s107, %s108
    %p120 = scmp.eq.s32.totalorder %s18, 3
    %p121 = por %p119, %p120
    %p123 = scmp.ne.s32.totalorder %s108, %s122
    %p124 = scmp.eq.s32.totalorder %s18, 0
    %p125 = por %p123, %p124
    %s127 = sadd.s32 %s126, 1
    %p130 = scmp.eq.s32.totalorder %s12, 3
    %p131 = scmp.ne.s32.totalorder %s126, %s128
    %p132 = scmp.eq.s32.totalorder %s12, 0
    %p133 = por %p131, %p132
    %p134 = scmp.ne.s32.totalorder %s126, %s128
    %p135 = scmp.eq.s32.totalorder %s17, 3
    %p136 = por %p134, %p135
    %p137 = scmp.ne.s32.totalorder %s128, %s129
    %p138 = scmp.eq.s32.totalorder %s17, 0
    %p139 = por %p137, %p138
    %p140 = scmp.ne.s32.totalorder %s128, %s129
    %p141 = scmp.eq.s32.totalorder %s18, 3
    %p142 = por %p140, %p141
    %p144 = scmp.ne.s32.totalorder %s129, %s143
    %p145 = scmp.eq.s32.totalorder %s18, 0
    %p146 = por %p144, %p145
    %s148 = sadd.s32 %s147, 1
    %p151 = scmp.eq.s32.totalorder %s12, 3
    %p152 = scmp.ne.s32.totalorder %s147, %s149
    %p153 = scmp.eq.s32.totalorder %s12, 0
    %p154 = por %p152, %p153
    %p155 = scmp.ne.s32.totalorder %s147, %s149
    %p156 = scmp.eq.s32.totalorder %s17, 3
    %p157 = por %p155, %p156
    %p158 = scmp.ne.s32.totalorder %s149, %s150
    %p159 = scmp.eq.s32.totalorder %s17, 0
    %p160 = por %p158, %p159
    %p161 = scmp.ne.s32.totalorder %s149, %s150
    %p162 = scmp.eq.s32.totalorder %s18, 3
    %p163 = por %p161, %p162
    %p165 = scmp.ne.s32.totalorder %s150, %s164
    %p166 = scmp.eq.s32.totalorder %s18, 0
    %p167 = por %p165, %p166
    %s168 = ssub.s32 %s19, %s31
    %p169 = scmp.eq.s32.totalorder %s168, 0
    %s171 = sadd.s32 %s170, 1
    %s172 = scalar_select %p169, %s170, %s171
    %p175 = pneg %p169
    %p176 = scmp.eq.s32.totalorder %s12, 3
    %p177 = por %p175, %p176
    %p178 = scmp.ne.s32.totalorder %s170, %s173
    %p179 = scmp.eq.s32.totalorder %s12, 0
    %p180 = por %p178, %p179
    %p181 = scmp.ne.s32.totalorder %s170, %s173
    %p182 = scmp.eq.s32.totalorder %s17, 3
    %p183 = por %p181, %p182
    %p184 = scmp.ne.s32.totalorder %s173, %s174
    %p185 = scmp.eq.s32.totalorder %s17, 0
    %p186 = por %p184, %p185
    %p187 = scmp.ne.s32.totalorder %s173, %s174
    %p188 = scmp.eq.s32.totalorder %s18, 3
    %p189 = por %p187, %p188
    %p191 = scmp.ne.s32.totalorder %s174, %s190
    %p192 = scmp.eq.s32.totalorder %s18, 0
    %p193 = por %p191, %p192
    %p194 = scmp.le.s32.totalorder 1, %s12
    %p195 = scmp.lt.s32.totalorder %s12, 5
    %p196 = pnand %p194, %p195
    %p197 = pneg %p196
    // Predicated region
    $region9: #{non_local_b_forward.1} parent=5 // pred_check
      _
    $region10: #{non_local_b_forward.1} parent=5 // pred_check_branch
      %199 = sbr.rel (%p196) target = $region12
    $region11: #{non_local_b_forward.1} parent=5 // pred_region
      %s200 = ssub.s32 %s12, 1
      // Predicated region
      $region13: #{non_local_b_forward.1} parent=11 // pred_check
        %p201 = pneg %p97
      $region14: #{non_local_b_forward.1} parent=11 // pred_check_branch
        %203 = sbr.rel (%p201) target = $region16
      $region15: #{non_local_b_forward.1} parent=11 // pred_region
        _
      $region16: #{non_local_b_forward.1} parent=11 // pred_fallthru
        _
      // Predicated region
      $region17: #{non_local_b_forward.1} parent=11 // pred_check
        %p204 = pneg %p118
      $region18: #{non_local_b_forward.1} parent=11 // pred_check_branch
        %206 = sbr.rel (%p204) target = $region20
      $region19: #{non_local_b_forward.1} parent=11 // pred_region
        _
      $region20: #{non_local_b_forward.1} parent=11 // pred_fallthru
        _
      // Predicated region
      $region21: #{non_local_b_forward.1} parent=11 // pred_check
        %p207 = pneg %p139
      $region22: #{non_local_b_forward.1} parent=11 // pred_check_branch
        %209 = sbr.rel (%p207) target = $region24
      $region23: #{non_local_b_forward.1} parent=11 // pred_region
        _
      $region24: #{non_local_b_forward.1} parent=11 // pred_fallthru
        _
      // Predicated region
      $region25: #{non_local_b_forward.1} parent=11 // pred_check
        %p210 = pneg %p160
      $region26: #{non_local_b_forward.1} parent=11 // pred_check_branch
        %212 = sbr.rel (%p210) target = $region28
      $region27: #{non_local_b_forward.1} parent=11 // pred_region
        _
      $region28: #{non_local_b_forward.1} parent=11 // pred_fallthru
        _
    $region12: #{non_local_b_forward.1} parent=5 // pred_fallthru
      _
    %p213 = scmp.lt.s32.totalorder %s12, 4
    // Predicated region
    $region29: #{non_local_b_forward.1} parent=5 // pred_check
      %p214 = pneg %p213
    $region30: #{non_local_b_forward.1} parent=5 // pred_check_branch
      %216 = sbr.rel (%p214) target = $region32
    $region31: #{non_local_b_forward.1} parent=5 // pred_region
      // Predicated region
      $region33: #{non_local_b_forward.1} parent=31 // pred_check
        %p217 = pneg %p44
      $region34: #{non_local_b_forward.1} parent=31 // pred_check_branch
        %219 = sbr.rel (%p217) target = $region36
      $region35: #{non_local_b_forward.1} parent=31 // pred_region
        %s220 = smul.u32 32, %s19
        %p221 = scmp.lt.s32.totalorder %s220, 63
        %s222 = scalar_select %p221, %s220, 63
        %s223 = smul.addr %s222, 8
        %s224 = scalar_lea.vmem %s0, %s223
        %s225 = smul.u32 32, %s19
      $region36: #{non_local_b_forward.1} parent=31 // pred_fallthru
        _
      // Predicated region
      $region37: #{non_local_b_forward.1} parent=31 // pred_check
        %p226 = pneg %p70
      $region38: #{non_local_b_forward.1} parent=31 // pred_check_branch
        %228 = sbr.rel (%p226) target = $region40
      $region39: #{non_local_b_forward.1} parent=31 // pred_region
        %s229 = smul.u32 32, %s20
        %p230 = scmp.lt.s32.totalorder %s229, 63
        %s231 = scalar_select %p230, %s229, 63
        %s232 = smul.addr %s231, 8
        %s233 = scalar_lea.vmem %s1, %s232
        %s234 = smul.u32 32, %s20
      $region40: #{non_local_b_forward.1} parent=31 // pred_fallthru
        _
    $region32: #{non_local_b_forward.1} parent=5 // pred_fallthru
      _
    %p235 = scmp.le.s32.totalorder 1, %s12
    %p236 = scmp.lt.s32.totalorder %s12, 5
    %p237 = pnand %p235, %p236
    %p238 = pneg %p237
    // Predicated region
    $region41: #{non_local_b_forward.1} parent=5 // pred_check
      _
    $region42: #{non_local_b_forward.1} parent=5 // pred_check_branch
      %240 = sbr.rel (%p237) target = $region44
    $region43: #{non_local_b_forward.1} parent=5 // pred_region
      %s241 = ssub.s32 %s12, 1
      %s242 = smul.u32 32, %s21
      %p243 = scmp.lt.s32.totalorder %s242, 63
      %s244 = scalar_select %p243, %s242, 63
      %s245 = smul.addr %s244, 8
      %s246 = scalar_lea.vmem %s0, %s245
      %p247 = pneg %p50
      %p248 = pneg %p47
      %s249 = smul.u32 32, %s22
      %p250 = scmp.lt.s32.totalorder %s249, 63
      %s251 = scalar_select %p250, %s249, 63
      %s252 = smul.addr %s251, 8
      %s253 = scalar_lea.vmem %s1, %s252
      %p254 = pneg %p76
      %p255 = pneg %p73
      %p256 = pneg %p97
      %p257 = pneg %p94
      %p258 = pneg %p118
      %p259 = pneg %p115
      %p260 = pneg %p139
      %p261 = pneg %p136
      %p262 = pneg %p160
      %p263 = pneg %p157
      %p264 = pneg %p186
      %p265 = pneg %p183
      %s266 = smul.u32 32, %s21
      %p267 = scmp.lt.s32.totalorder %s266, 63
      %s268 = scalar_select %p267, %s266, 63
      %s269 = smul.addr %s268, 8
      %s270 = scalar_lea.vmem %s6, %s269
      %s271 = smul.u32 32, %s21
      %p272 = scmp.lt.s32.totalorder %s271, 63
      %s273 = scalar_select %p272, %s271, 63
      %s274 = smul.addr %s273, 8
      %s275 = scalar_lea.vmem %s0, %s274
      %s276 = smul.u32 32, %s21
      %s277 = smul.u32 32, %s22
      %p278 = scmp.lt.s32.totalorder %s277, 63
      %s279 = scalar_select %p278, %s277, 63
      %s280 = smul.addr %s279, 8
      %s281 = scalar_lea.vmem %s1, %s280
      %s282 = smul.u32 32, %s22
      %s283 = smul.u32 32, %s21
      %p284 = scmp.lt.s32.totalorder %s283, 63
      %s285 = scalar_select %p284, %s283, 63
      %s286 = smul.addr %s285, 8
      %s287 = scalar_lea.vmem %s6, %s286
      %s288 = smul.u32 32, %s21
      %p290 = scmp.eq.s32.totalorder %s22, 0
      // Predicated region
      $region45: #{non_local_b_forward.1} parent=43 // pred_check
        %p291 = pneg %p290
      $region46: #{non_local_b_forward.1} parent=43 // pred_check_branch
        %293 = sbr.rel (%p291) target = $region48
      $region47: #{non_local_b_forward.1} parent=43 // pred_region
        %v294 = vld [vmem:[%s275] sm:$0xff]
        %v295 = vld [vmem:[%s275 + $0x8] sm:$0xff]
        %v296 = vld [vmem:[%s275 + $0x10] sm:$0xff]
        %v297 = vld [vmem:[%s275 + $0x18] sm:$0xff]
        %v298 = vld [vmem:[%s275 + $0x20] sm:$0xff]
        %v299 = vld [vmem:[%s275 + $0x28] sm:$0xff]
        %v300 = vld [vmem:[%s275 + $0x30] sm:$0xff]
        %v301 = vld [vmem:[%s275 + $0x38] sm:$0xff]
        %v302 = vld [vmem:[%s275 + $0x40] sm:$0xff]
        %v303 = vld [vmem:[%s275 + $0x48] sm:$0xff]
        %v304 = vld [vmem:[%s275 + $0x50] sm:$0xff]
        %v305 = vld [vmem:[%s275 + $0x58] sm:$0xff]
        %v306 = vld [vmem:[%s275 + $0x60] sm:$0xff]
        %v307 = vld [vmem:[%s275 + $0x68] sm:$0xff]
        %v308 = vld [vmem:[%s275 + $0x70] sm:$0xff]
        %v309 = vld [vmem:[%s275 + $0x78] sm:$0xff]
        %v310 = vld [vmem:[%s275 + $0x80] sm:$0xff]
        %v311 = vld [vmem:[%s275 + $0x88] sm:$0xff]
        %v312 = vld [vmem:[%s275 + $0x90] sm:$0xff]
        %v313 = vld [vmem:[%s275 + $0x98] sm:$0xff]
        %v314 = vld [vmem:[%s275 + $0xa0] sm:$0xff]
        %v315 = vld [vmem:[%s275 + $0xa8] sm:$0xff]
        %v316 = vld [vmem:[%s275 + $0xb0] sm:$0xff]
        %v317 = vld [vmem:[%s275 + $0xb8] sm:$0xff]
        %v318 = vld [vmem:[%s275 + $0xc0] sm:$0xff]
        %v319 = vld [vmem:[%s275 + $0xc8] sm:$0xff]
        %v320 = vld [vmem:[%s275 + $0xd0] sm:$0xff]
        %v321 = vld [vmem:[%s275 + $0xd8] sm:$0xff]
        %v322 = vld [vmem:[%s275 + $0xe0] sm:$0xff]
        %v323 = vld [vmem:[%s275 + $0xe8] sm:$0xff]
        %v324 = vld [vmem:[%s275 + $0xf0] sm:$0xff]
        %v325 = vld [vmem:[%s275 + $0xf8] sm:$0xff]
        %v326 = vld [vmem:[%s2] sm:$0xff]
        %v327 = vld [vmem:[%s2 + $0x8] sm:$0xff]
        %v328 = vld [vmem:[%s2 + $0x10] sm:$0xff]
        %v329 = vld [vmem:[%s2 + $0x18] sm:$0xff]
        %v330 = vld [vmem:[%s3] sm:$0x1]
        %v332 = vlaneseq
        %v333 = vshrl.u32 %v332, 7
        %v334 = vsub.s32 0, %v333
        %v335 = vrot.slane %v330, %v334
        %vm337 = vcmask 261120
        %v339 = vsel %vm337, %v294, 0
        %v342 = vsel %vm337, %v295, 0
        %v345 = vsel %vm337, %v296, 0
        %v348 = vsel %vm337, %v297, 0
        %v351 = vsel %vm337, %v298, 0
        %v354 = vsel %vm337, %v299, 0
        %v357 = vsel %vm337, %v300, 0
        %v360 = vsel %vm337, %v301, 0
        %v363 = vsel %vm337, %v302, 0
        %v366 = vsel %vm337, %v303, 0
        %v369 = vsel %vm337, %v304, 0
        %v372 = vsel %vm337, %v305, 0
        %v375 = vsel %vm337, %v306, 0
        %v378 = vsel %vm337, %v307, 0
        %v381 = vsel %vm337, %v308, 0
        %v384 = vsel %vm337, %v309, 0
        %v387 = vsel %vm337, %v310, 0
        %v390 = vsel %vm337, %v311, 0
        %v393 = vsel %vm337, %v312, 0
        %v396 = vsel %vm337, %v313, 0
        %v399 = vsel %vm337, %v314, 0
        %v402 = vsel %vm337, %v315, 0
        %v405 = vsel %vm337, %v316, 0
        %v408 = vsel %vm337, %v317, 0
        %v411 = vsel %vm337, %v318, 0
        %v414 = vsel %vm337, %v319, 0
        %v417 = vsel %vm337, %v320, 0
        %v420 = vsel %vm337, %v321, 0
        %v423 = vsel %vm337, %v322, 0
        %v426 = vsel %vm337, %v323, 0
        %v429 = vsel %vm337, %v324, 0
        %v432 = vsel %vm337, %v325, 0
        %434 = vmatprep.subr.mxu0 0.0
        %435 = vmatpush1.msra.mxu0 %v326
        %436 = vmatprep.subr.mxu0 0.0
        %437 = vmatpush1.msra.mxu0 %v327
        %438 = vmatprep.subr.mxu0 0.0
        %439 = vmatpush1.msra.mxu0 %v328
        %440 = vmatprep.subr.mxu0 0.0
        %441 = vmatpush1.msra.mxu0 %v329
        %442 = vmatprep.subr.mxu0 0.0
        %443 = vmatpush1.msra.mxu0 0.0
        %444 = vmatprep.subr.mxu0 0.0
        %445 = vmatpush1.msra.mxu0 0.0
        %446 = vmatprep.subr.mxu0 0.0
        %447 = vmatpush1.msra.mxu0 0.0
        %448 = vmatprep.subr.mxu0 0.0
        %449 = vmatpush1.msra.mxu0 0.0
        %450 = vmatprep.subr.mxu0 0.0
        %451 = vmatpush1.msra.mxu0 0.0
        %452 = vmatprep.subr.mxu0 0.0
        %453 = vmatpush1.msra.mxu0 0.0
        %454 = vmatprep.subr.mxu0 0.0
        %455 = vmatpush1.msra.mxu0 0.0
        %456 = vmatprep.subr.mxu0 0.0
        %457 = vmatpush1.msra.mxu0 0.0
        %458 = vmatprep.subr.mxu0 0.0
        %459 = vmatpush1.msra.mxu0 0.0
        %460 = vmatprep.subr.mxu0 0.0
        %461 = vmatpush1.msra.mxu0 0.0
        %462 = vmatprep.subr.mxu0 0.0
        %463 = vmatpush1.msra.mxu0 0.0
        %464 = vmatprep.subr.mxu0 0.0
        %465 = vmatpush1.msra.mxu0 0.0
        %466 = vmatprep.subr.mxu0 0.0
        %467 = vmatpush1.msra.mxu0 0.0
        %468 = vmatprep.subr.mxu0 0.0
        %469 = vmatpush1.msra.mxu0 0.0
        %470 = vmatprep.subr.mxu0 0.0
        %471 = vmatpush1.msra.mxu0 0.0
        %472 = vmatprep.subr.mxu0 0.0
        %473 = vmatpush1.msra.mxu0 0.0
        %474 = vmatprep.subr.mxu0 0.0
        %475 = vmatpush1.msra.mxu0 0.0
        %476 = vmatprep.subr.mxu0 0.0
        %477 = vmatpush1.msra.mxu0 0.0
        %478 = vmatprep.subr.mxu0 0.0
        %479 = vmatpush1.msra.mxu0 0.0
        %480 = vmatprep.subr.mxu0 0.0
        %481 = vmatpush1.msra.mxu0 0.0
        %482 = vmatprep.subr.mxu0 0.0
        %483 = vmatpush1.msra.mxu0 0.0
        %484 = vmatprep.subr.mxu0 0.0
        %485 = vmatpush1.msra.mxu0 0.0
        %486 = vmatprep.subr.mxu0 0.0
        %487 = vmatpush1.msra.mxu0 0.0
        %488 = vmatprep.subr.mxu0 0.0
        %489 = vmatpush1.msra.mxu0 0.0
        %490 = vmatprep.subr.mxu0 0.0
        %491 = vmatpush1.msra.mxu0 0.0
        %492 = vmatprep.subr.mxu0 0.0
        %493 = vmatpush1.msra.mxu0 0.0
        %494 = vmatprep.subr.mxu0 0.0
        %495 = vmatpush1.msra.mxu0 0.0
        %496 = vmatprep.subr.mxu0 0.0
        %497 = vmatpush1.msra.mxu0 0.0
        %498 = vmatprep.mubr.f32.mxu0 0.0
        %499 = vmatmul.mubr.f32.gmra.mrb[0].mxu0 %v339
        %v500 = vpop.f32.mrb[0].mxu0
        %v501 = vadd.f32 %v335, %v500
        %v502 = vpop.f32.mrb[0].mxu0
        %503 = vmatprep.mubr.f32.mxu0 0.0
        %504 = vmatmul.mubr.f32.gmra.mrb[0].mxu0 %v342
        %v505 = vpop.f32.mrb[0].mxu0
        %v506 = vadd.f32 %v335, %v505
        %v507 = vpop.f32.mrb[0].mxu0
        %508 = vmatprep.mubr.f32.mxu0 0.0
        %509 = vmatmul.mubr.f32.gmra.mrb[0].mxu0 %v345
        %v510 = vpop.f32.mrb[0].mxu0
        %v511 = vadd.f32 %v335, %v510
        %v512 = vpop.f32.mrb[0].mxu0
        %513 = vmatprep.mubr.f32.mxu0 0.0
        %514 = vmatmul.mubr.f32.gmra.mrb[0].mxu0 %v348
        %v515 = vpop.f32.mrb[0].mxu0
        %v516 = vadd.f32 %v335, %v515
        %v517 = vpop.f32.mrb[0].mxu0
        %518 = vmatprep.mubr.f32.mxu0 0.0
        %519 = vmatmul.mubr.f32.gmra.mrb[0].mxu0 %v351
        %v520 = vpop.f32.mrb[0].mxu0
        %v521 = vadd.f32 %v335, %v520
        %v522 = vpop.f32.mrb[0].mxu0
        %523 = vmatprep.mubr.f32.mxu0 0.0
        %524 = vmatmul.mubr.f32.gmra.mrb[0].mxu0 %v354
        %v525 = vpop.f32.mrb[0].mxu0
        %v526 = vadd.f32 %v335, %v525
        %v527 = vpop.f32.mrb[0].mxu0
        %528 = vmatprep.mubr.f32.mxu0 0.0
        %529 = vmatmul.mubr.f32.gmra.mrb[0].mxu0 %v357
        %v530 = vpop.f32.mrb[0].mxu0
        %v531 = vadd.f32 %v335, %v530
        %v532 = vpop.f32.mrb[0].mxu0
        %533 = vmatprep.mubr.f32.mxu0 0.0
        %534 = vmatmul.mubr.f32.gmra.mrb[0].mxu0 %v360
        %v535 = vpop.f32.mrb[0].mxu0
        %v536 = vadd.f32 %v335, %v535
        %v537 = vpop.f32.mrb[0].mxu0
        %538 = vmatprep.mubr.f32.mxu0 0.0
        %539 = vmatmul.mubr.f32.gmra.mrb[0].mxu0 %v363
        %v540 = vpop.f32.mrb[0].mxu0
        %v541 = vadd.f32 %v335, %v540
        %v542 = vpop.f32.mrb[0].mxu0
        %543 = vmatprep.mubr.f32.mxu0 0.0
        %544 = vmatmul.mubr.f32.gmra.mrb[0].mxu0 %v366
        %v545 = vpop.f32.mrb[0].mxu0
        %v546 = vadd.f32 %v335, %v545
        %v547 = vpop.f32.mrb[0].mxu0
        %548 = vmatprep.mubr.f32.mxu0 0.0
        %549 = vmatmul.mubr.f32.gmra.mrb[0].mxu0 %v369
        %v550 = vpop.f32.mrb[0].mxu0
        %v551 = vadd.f32 %v335, %v550
        %v552 = vpop.f32.mrb[0].mxu0
        %553 = vmatprep.mubr.f32.mxu0 0.0
        %554 = vmatmul.mubr.f32.gmra.mrb[0].mxu0 %v372
        %v555 = vpop.f32.mrb[0].mxu0
        %v556 = vadd.f32 %v335, %v555
        %v557 = vpop.f32.mrb[0].mxu0
        %558 = vmatprep.mubr.f32.mxu0 0.0
        %559 = vmatmul.mubr.f32.gmra.mrb[0].mxu0 %v375
        %v560 = vpop.f32.mrb[0].mxu0
        %v561 = vadd.f32 %v335, %v560
        %v562 = vpop.f32.mrb[0].mxu0
        %563 = vmatprep.mubr.f32.mxu0 0.0
        %564 = vmatmul.mubr.f32.gmra.mrb[0].mxu0 %v378
        %v565 = vpop.f32.mrb[0].mxu0
        %v566 = vadd.f32 %v335, %v565
        %v567 = vpop.f32.mrb[0].mxu0
        %568 = vmatprep.mubr.f32.mxu0 0.0
        %569 = vmatmul.mubr.f32.gmra.mrb[0].mxu0 %v381
        %v570 = vpop.f32.mrb[0].mxu0
        %v571 = vadd.f32 %v335, %v570
        %v572 = vpop.f32.mrb[0].mxu0
        %573 = vmatprep.mubr.f32.mxu0 0.0
        %574 = vmatmul.mubr.f32.gmra.mrb[0].mxu0 %v384
        %v575 = vpop.f32.mrb[0].mxu0
        %v576 = vadd.f32 %v335, %v575
        %v577 = vpop.f32.mrb[0].mxu0
        %578 = vmatprep.mubr.f32.mxu0 0.0
        %579 = vmatmul.mubr.f32.gmra.mrb[0].mxu0 %v387
        %v580 = vpop.f32.mrb[0].mxu0
        %v581 = vadd.f32 %v335, %v580
        %v582 = vpop.f32.mrb[0].mxu0
        %583 = vmatprep.mubr.f32.mxu0 0.0
        %584 = vmatmul.mubr.f32.gmra.mrb[0].mxu0 %v390
        %v585 = vpop.f32.mrb[0].mxu0
        %v586 = vadd.f32 %v335, %v585
        %v587 = vpop.f32.mrb[0].mxu0
        %588 = vmatprep.mubr.f32.mxu0 0.0
        %589 = vmatmul.mubr.f32.gmra.mrb[0].mxu0 %v393
        %v590 = vpop.f32.mrb[0].mxu0
        %v591 = vadd.f32 %v335, %v590
        %v592 = vpop.f32.mrb[0].mxu0
        %593 = vmatprep.mubr.f32.mxu0 0.0
        %594 = vmatmul.mubr.f32.gmra.mrb[0].mxu0 %v396
        %v595 = vpop.f32.mrb[0].mxu0
        %v596 = vadd.f32 %v335, %v595
        %v597 = vpop.f32.mrb[0].mxu0
        %598 = vmatprep.mubr.f32.mxu0 0.0
        %599 = vmatmul.mubr.f32.gmra.mrb[0].mxu0 %v399
        %v600 = vpop.f32.mrb[0].mxu0
        %v601 = vadd.f32 %v335, %v600
        %v602 = vpop.f32.mrb[0].mxu0
        %603 = vmatprep.mubr.f32.mxu0 0.0
        %604 = vmatmul.mubr.f32.gmra.mrb[0].mxu0 %v402
        %v605 = vpop.f32.mrb[0].mxu0
        %v606 = vadd.f32 %v335, %v605
        %v607 = vpop.f32.mrb[0].mxu0
        %608 = vmatprep.mubr.f32.mxu0 0.0
        %609 = vmatmul.mubr.f32.gmra.mrb[0].mxu0 %v405
        %v610 = vpop.f32.mrb[0].mxu0
        %v611 = vadd.f32 %v335, %v610
        %v612 = vpop.f32.mrb[0].mxu0
        %613 = vmatprep.mubr.f32.mxu0 0.0
        %614 = vmatmul.mubr.f32.gmra.mrb[0].mxu0 %v408
        %v615 = vpop.f32.mrb[0].mxu0
        %v616 = vadd.f32 %v335, %v615
        %v617 = vpop.f32.mrb[0].mxu0
        %618 = vmatprep.mubr.f32.mxu0 0.0
        %619 = vmatmul.mubr.f32.gmra.mrb[0].mxu0 %v411
        %v620 = vpop.f32.mrb[0].mxu0
        %v621 = vadd.f32 %v335, %v620
        %v622 = vpop.f32.mrb[0].mxu0
        %623 = vmatprep.mubr.f32.mxu0 0.0
        %624 = vmatmul.mubr.f32.gmra.mrb[0].mxu0 %v414
        %v625 = vpop.f32.mrb[0].mxu0
        %v626 = vadd.f32 %v335, %v625
        %v627 = vpop.f32.mrb[0].mxu0
        %628 = vmatprep.mubr.f32.mxu0 0.0
        %629 = vmatmul.mubr.f32.gmra.mrb[0].mxu0 %v417
        %v630 = vpop.f32.mrb[0].mxu0
        %v631 = vadd.f32 %v335, %v630
        %v632 = vpop.f32.mrb[0].mxu0
        %633 = vmatprep.mubr.f32.mxu0 0.0
        %634 = vmatmul.mubr.f32.gmra.mrb[0].mxu0 %v420
        %v635 = vpop.f32.mrb[0].mxu0
        %v636 = vadd.f32 %v335, %v635
        %v637 = vpop.f32.mrb[0].mxu0
        %638 = vmatprep.mubr.f32.mxu0 0.0
        %639 = vmatmul.mubr.f32.gmra.mrb[0].mxu0 %v423
        %v640 = vpop.f32.mrb[0].mxu0
        %v641 = vadd.f32 %v335, %v640
        %v642 = vpop.f32.mrb[0].mxu0
        %643 = vmatprep.mubr.f32.mxu0 0.0
        %644 = vmatmul.mubr.f32.gmra.mrb[0].mxu0 %v426
        %v645 = vpop.f32.mrb[0].mxu0
        %v646 = vadd.f32 %v335, %v645
        %v647 = vpop.f32.mrb[0].mxu0
        %648 = vmatprep.mubr.f32.mxu0 0.0
        %649 = vmatmul.mubr.f32.gmra.mrb[0].mxu0 %v429
        %v650 = vpop.f32.mrb[0].mxu0
        %v651 = vadd.f32 %v335, %v650
        %v652 = vpop.f32.mrb[0].mxu0
        %653 = vmatprep.mubr.f32.mxu0 0.0
        %654 = vmatmul.mubr.f32.gmra.mrb[0].mxu0 %v432
        %v655 = vpop.f32.mrb[0].mxu0
        %v656 = vadd.f32 %v335, %v655
        %v657 = vpop.f32.mrb[0].mxu0
        %658 = vdwg.mxu0
        %vm659 = vcmask 130048
        %660 = vst.msk [vmem:[#allocation2] sm:$0xff] %vm659, %v501
        %661 = vst.msk [vmem:[#allocation2 + $0x8] sm:$0xff] %vm659, %v506
        %662 = vst.msk [vmem:[#allocation2 + $0x10] sm:$0xff] %vm659, %v511
        %663 = vst.msk [vmem:[#allocation2 + $0x18] sm:$0xff] %vm659, %v516
        %664 = vst.msk [vmem:[#allocation2 + $0x20] sm:$0xff] %vm659, %v521
        %665 = vst.msk [vmem:[#allocation2 + $0x28] sm:$0xff] %vm659, %v526
        %666 = vst.msk [vmem:[#allocation2 + $0x30] sm:$0xff] %vm659, %v531
        %667 = vst.msk [vmem:[#allocation2 + $0x38] sm:$0xff] %vm659, %v536
        %668 = vst.msk [vmem:[#allocation2 + $0x40] sm:$0xff] %vm659, %v541
        %669 = vst.msk [vmem:[#allocation2 + $0x48] sm:$0xff] %vm659, %v546
        %670 = vst.msk [vmem:[#allocation2 + $0x50] sm:$0xff] %vm659, %v551
        %671 = vst.msk [vmem:[#allocation2 + $0x58] sm:$0xff] %vm659, %v556
        %672 = vst.msk [vmem:[#allocation2 + $0x60] sm:$0xff] %vm659, %v561
        %673 = vst.msk [vmem:[#allocation2 + $0x68] sm:$0xff] %vm659, %v566
        %674 = vst.msk [vmem:[#allocation2 + $0x70] sm:$0xff] %vm659, %v571
        %675 = vst.msk [vmem:[#allocation2 + $0x78] sm:$0xff] %vm659, %v576
        %676 = vst.msk [vmem:[#allocation2 + $0x80] sm:$0xff] %vm659, %v581
        %677 = vst.msk [vmem:[#allocation2 + $0x88] sm:$0xff] %vm659, %v586
        %678 = vst.msk [vmem:[#allocation2 + $0x90] sm:$0xff] %vm659, %v591
        %679 = vst.msk [vmem:[#allocation2 + $0x98] sm:$0xff] %vm659, %v596
        %680 = vst.msk [vmem:[#allocation2 + $0xa0] sm:$0xff] %vm659, %v601
        %681 = vst.msk [vmem:[#allocation2 + $0xa8] sm:$0xff] %vm659, %v606
        %682 = vst.msk [vmem:[#allocation2 + $0xb0] sm:$0xff] %vm659, %v611
        %683 = vst.msk [vmem:[#allocation2 + $0xb8] sm:$0xff] %vm659, %v616
        %684 = vst.msk [vmem:[#allocation2 + $0xc0] sm:$0xff] %vm659, %v621
        %685 = vst.msk [vmem:[#allocation2 + $0xc8] sm:$0xff] %vm659, %v626
        %686 = vst.msk [vmem:[#allocation2 + $0xd0] sm:$0xff] %vm659, %v631
        %687 = vst.msk [vmem:[#allocation2 + $0xd8] sm:$0xff] %vm659, %v636
        %688 = vst.msk [vmem:[#allocation2 + $0xe0] sm:$0xff] %vm659, %v641
        %689 = vst.msk [vmem:[#allocation2 + $0xe8] sm:$0xff] %vm659, %v646
        %690 = vst.msk [vmem:[#allocation2 + $0xf0] sm:$0xff] %vm659, %v651
        %691 = vst.msk [vmem:[#allocation2 + $0xf8] sm:$0xff] %vm659, %v656
        %692 = vst.msk [vmem:[#allocation3] sm:$0xff] %vm337, 0.0
        %693 = vst.msk [vmem:[#allocation3 + $0x8] sm:$0xff] %vm337, 0.0
        %694 = vst.msk [vmem:[#allocation3 + $0x10] sm:$0xff] %vm337, 0.0
        %695 = vst.msk [vmem:[#allocation3 + $0x18] sm:$0xff] %vm337, 0.0
        %696 = vst.msk [vmem:[#allocation3 + $0x20] sm:$0xff] %vm337, 0.0
        %697 = vst.msk [vmem:[#allocation3 + $0x28] sm:$0xff] %vm337, 0.0
        %698 = vst.msk [vmem:[#allocation3 + $0x30] sm:$0xff] %vm337, 0.0
        %699 = vst.msk [vmem:[#allocation3 + $0x38] sm:$0xff] %vm337, 0.0
        %700 = vst.msk [vmem:[#allocation3 + $0x40] sm:$0xff] %vm337, 0.0
        %701 = vst.msk [vmem:[#allocation3 + $0x48] sm:$0xff] %vm337, 0.0
        %702 = vst.msk [vmem:[#allocation3 + $0x50] sm:$0xff] %vm337, 0.0
        %703 = vst.msk [vmem:[#allocation3 + $0x58] sm:$0xff] %vm337, 0.0
        %704 = vst.msk [vmem:[#allocation3 + $0x60] sm:$0xff] %vm337, 0.0
        %705 = vst.msk [vmem:[#allocation3 + $0x68] sm:$0xff] %vm337, 0.0
        %706 = vst.msk [vmem:[#allocation3 + $0x70] sm:$0xff] %vm337, 0.0
        %707 = vst.msk [vmem:[#allocation3 + $0x78] sm:$0xff] %vm337, 0.0
        %708 = vst.msk [vmem:[#allocation3 + $0x80] sm:$0xff] %vm337, 0.0
        %709 = vst.msk [vmem:[#allocation3 + $0x88] sm:$0xff] %vm337, 0.0
        %710 = vst.msk [vmem:[#allocation3 + $0x90] sm:$0xff] %vm337, 0.0
        %711 = vst.msk [vmem:[#allocation3 + $0x98] sm:$0xff] %vm337, 0.0
        %712 = vst.msk [vmem:[#allocation3 + $0xa0] sm:$0xff] %vm337, 0.0
        %713 = vst.msk [vmem:[#allocation3 + $0xa8] sm:$0xff] %vm337, 0.0
        %714 = vst.msk [vmem:[#allocation3 + $0xb0] sm:$0xff] %vm337, 0.0
        %715 = vst.msk [vmem:[#allocation3 + $0xb8] sm:$0xff] %vm337, 0.0
        %716 = vst.msk [vmem:[#allocation3 + $0xc0] sm:$0xff] %vm337, 0.0
        %717 = vst.msk [vmem:[#allocation3 + $0xc8] sm:$0xff] %vm337, 0.0
        %718 = vst.msk [vmem:[#allocation3 + $0xd0] sm:$0xff] %vm337, 0.0
        %719 = vst.msk [vmem:[#allocation3 + $0xd8] sm:$0xff] %vm337, 0.0
        %720 = vst.msk [vmem:[#allocation3 + $0xe0] sm:$0xff] %vm337, 0.0
        %721 = vst.msk [vmem:[#allocation3 + $0xe8] sm:$0xff] %vm337, 0.0
        %722 = vst.msk [vmem:[#allocation3 + $0xf0] sm:$0xff] %vm337, 0.0
        %723 = vst.msk [vmem:[#allocation3 + $0xf8] sm:$0xff] %vm337, 0.0
      $region48: #{non_local_b_forward.1} parent=43 // pred_fallthru
        _
      %v724 = vld [vmem:[%s281] sm:$0xff]
      %v725 = vld [vmem:[%s281 + $0x8] sm:$0xff]
      %v726 = vld [vmem:[%s281 + $0x10] sm:$0xff]
      %v727 = vld [vmem:[%s281 + $0x18] sm:$0xff]
      %v728 = vld [vmem:[%s281 + $0x20] sm:$0xff]
      %v729 = vld [vmem:[%s281 + $0x28] sm:$0xff]
      %v730 = vld [vmem:[%s281 + $0x30] sm:$0xff]
      %v731 = vld [vmem:[%s281 + $0x38] sm:$0xff]
      %v732 = vld [vmem:[%s281 + $0x40] sm:$0xff]
      %v733 = vld [vmem:[%s281 + $0x48] sm:$0xff]
      %v734 = vld [vmem:[%s281 + $0x50] sm:$0xff]
      %v735 = vld [vmem:[%s281 + $0x58] sm:$0xff]
      %v736 = vld [vmem:[%s281 + $0x60] sm:$0xff]
      %v737 = vld [vmem:[%s281 + $0x68] sm:$0xff]
      %v738 = vld [vmem:[%s281 + $0x70] sm:$0xff]
      %v739 = vld [vmem:[%s281 + $0x78] sm:$0xff]
      %v740 = vld [vmem:[%s281 + $0x80] sm:$0xff]
      %v741 = vld [vmem:[%s281 + $0x88] sm:$0xff]
      %v742 = vld [vmem:[%s281 + $0x90] sm:$0xff]
      %v743 = vld [vmem:[%s281 + $0x98] sm:$0xff]
      %v744 = vld [vmem:[%s281 + $0xa0] sm:$0xff]
      %v745 = vld [vmem:[%s281 + $0xa8] sm:$0xff]
      %v746 = vld [vmem:[%s281 + $0xb0] sm:$0xff]
      %v747 = vld [vmem:[%s281 + $0xb8] sm:$0xff]
      %v748 = vld [vmem:[%s281 + $0xc0] sm:$0xff]
      %v749 = vld [vmem:[%s281 + $0xc8] sm:$0xff]
      %v750 = vld [vmem:[%s281 + $0xd0] sm:$0xff]
      %v751 = vld [vmem:[%s281 + $0xd8] sm:$0xff]
      %v752 = vld [vmem:[%s281 + $0xe0] sm:$0xff]
      %v753 = vld [vmem:[%s281 + $0xe8] sm:$0xff]
      %v754 = vld [vmem:[%s281 + $0xf0] sm:$0xff]
      %v755 = vld [vmem:[%s281 + $0xf8] sm:$0xff]
      %v756 = vld [vmem:[%s4] sm:$0xff]
      %v757 = vld [vmem:[%s4 + $0x8] sm:$0xff]
      %v758 = vld [vmem:[%s4 + $0x10] sm:$0xff]
      %v759 = vld [vmem:[%s4 + $0x18] sm:$0xff]
      %v760 = vld [vmem:[%s5] sm:$0x1]
      %v762 = vlaneseq
      %v763 = vshrl.u32 %v762, 7
      %v764 = vsub.s32 0, %v763
      %v765 = vrot.slane %v760, %v764
      %vm767 = vcmask 261120
      %v769 = vsel %vm767, %v724, 0
      %v772 = vsel %vm767, %v725, 0
      %v775 = vsel %vm767, %v726, 0
      %v778 = vsel %vm767, %v727, 0
      %v781 = vsel %vm767, %v728, 0
      %v784 = vsel %vm767, %v729, 0
      %v787 = vsel %vm767, %v730, 0
      %v790 = vsel %vm767, %v731, 0
      %v793 = vsel %vm767, %v732, 0
      %v796 = vsel %vm767, %v733, 0
      %v799 = vsel %vm767, %v734, 0
      %v802 = vsel %vm767, %v735, 0
      %v805 = vsel %vm767, %v736, 0
      %v808 = vsel %vm767, %v737, 0
      %v811 = vsel %vm767, %v738, 0
      %v814 = vsel %vm767, %v739, 0
      %v817 = vsel %vm767, %v740, 0
      %v820 = vsel %vm767, %v741, 0
      %v823 = vsel %vm767, %v742, 0
      %v826 = vsel %vm767, %v743, 0
      %v829 = vsel %vm767, %v744, 0
      %v832 = vsel %vm767, %v745, 0
      %v835 = vsel %vm767, %v746, 0
      %v838 = vsel %vm767, %v747, 0
      %v841 = vsel %vm767, %v748, 0
      %v844 = vsel %vm767, %v749, 0
      %v847 = vsel %vm767, %v750, 0
      %v850 = vsel %vm767, %v751, 0
      %v853 = vsel %vm767, %v752, 0
      %v856 = vsel %vm767, %v753, 0
      %v859 = vsel %vm767, %v754, 0
      %v862 = vsel %vm767, %v755, 0
      %864 = vmatprep.subr.mxu0 0.0
      %865 = vmatpush1.msra.mxu0 %v756
      %866 = vmatprep.subr.mxu0 0.0
      %867 = vmatpush1.msra.mxu0 %v757
      %868 = vmatprep.subr.mxu0 0.0
      %869 = vmatpush1.msra.mxu0 %v758
      %870 = vmatprep.subr.mxu0 0.0
      %871 = vmatpush1.msra.mxu0 %v759
      %872 = vmatprep.subr.mxu0 0.0
      %873 = vmatpush1.msra.mxu0 0.0
      %874 = vmatprep.subr.mxu0 0.0
      %875 = vmatpush1.msra.mxu0 0.0
      %876 = vmatprep.subr.mxu0 0.0
      %877 = vmatpush1.msra.mxu0 0.0
      %878 = vmatprep.subr.mxu0 0.0
      %879 = vmatpush1.msra.mxu0 0.0
      %880 = vmatprep.subr.mxu0 0.0
      %881 = vmatpush1.msra.mxu0 0.0
      %882 = vmatprep.subr.mxu0 0.0
      %883 = vmatpush1.msra.mxu0 0.0
      %884 = vmatprep.subr.mxu0 0.0
      %885 = vmatpush1.msra.mxu0 0.0
      %886 = vmatprep.subr.mxu0 0.0
      %887 = vmatpush1.msra.mxu0 0.0
      %888 = vmatprep.subr.mxu0 0.0
      %889 = vmatpush1.msra.mxu0 0.0
      %890 = vmatprep.subr.mxu0 0.0
      %891 = vmatpush1.msra.mxu0 0.0
      %892 = vmatprep.subr.mxu0 0.0
      %893 = vmatpush1.msra.mxu0 0.0
      %894 = vmatprep.subr.mxu0 0.0
      %895 = vmatpush1.msra.mxu0 0.0
      %896 = vmatprep.subr.mxu0 0.0
      %897 = vmatpush1.msra.mxu0 0.0
      %898 = vmatprep.subr.mxu0 0.0
      %899 = vmatpush1.msra.mxu0 0.0
      %900 = vmatprep.subr.mxu0 0.0
      %901 = vmatpush1.msra.mxu0 0.0
      %902 = vmatprep.subr.mxu0 0.0
      %903 = vmatpush1.msra.mxu0 0.0
      %904 = vmatprep.subr.mxu0 0.0
      %905 = vmatpush1.msra.mxu0 0.0
      %906 = vmatprep.subr.mxu0 0.0
      %907 = vmatpush1.msra.mxu0 0.0
      %908 = vmatprep.subr.mxu0 0.0
      %909 = vmatpush1.msra.mxu0 0.0
      %910 = vmatprep.subr.mxu0 0.0
      %911 = vmatpush1.msra.mxu0 0.0
      %912 = vmatprep.subr.mxu0 0.0
      %913 = vmatpush1.msra.mxu0 0.0
      %914 = vmatprep.subr.mxu0 0.0
      %915 = vmatpush1.msra.mxu0 0.0
      %916 = vmatprep.subr.mxu0 0.0
      %917 = vmatpush1.msra.mxu0 0.0
      %918 = vmatprep.subr.mxu0 0.0
      %919 = vmatpush1.msra.mxu0 0.0
      %920 = vmatprep.subr.mxu0 0.0
      %921 = vmatpush1.msra.mxu0 0.0
      %922 = vmatprep.subr.mxu0 0.0
      %923 = vmatpush1.msra.mxu0 0.0
      %924 = vmatprep.subr.mxu0 0.0
      %925 = vmatpush1.msra.mxu0 0.0
      %926 = vmatprep.subr.mxu0 0.0
      %927 = vmatpush1.msra.mxu0 0.0
      %928 = vmatprep.mubr.f32.mxu0 0.0
      %929 = vmatmul.mubr.f32.gmra.mrb[0].mxu0 %v769
      %v930 = vpop.f32.mrb[0].mxu0
      %v931 = vadd.f32 %v765, %v930
      %v932 = vpop.f32.mrb[0].mxu0
      %933 = vmatprep.mubr.f32.mxu0 0.0
      %934 = vmatmul.mubr.f32.gmra.mrb[0].mxu0 %v772
      %v935 = vpop.f32.mrb[0].mxu0
      %v936 = vadd.f32 %v765, %v935
      %v937 = vpop.f32.mrb[0].mxu0
      %938 = vmatprep.mubr.f32.mxu0 0.0
      %939 = vmatmul.mubr.f32.gmra.mrb[0].mxu0 %v775
      %v940 = vpop.f32.mrb[0].mxu0
      %v941 = vadd.f32 %v765, %v940
      %v942 = vpop.f32.mrb[0].mxu0
      %943 = vmatprep.mubr.f32.mxu0 0.0
      %944 = vmatmul.mubr.f32.gmra.mrb[0].mxu0 %v778
      %v945 = vpop.f32.mrb[0].mxu0
      %v946 = vadd.f32 %v765, %v945
      %v947 = vpop.f32.mrb[0].mxu0
      %948 = vmatprep.mubr.f32.mxu0 0.0
      %949 = vmatmul.mubr.f32.gmra.mrb[0].mxu0 %v781
      %v950 = vpop.f32.mrb[0].mxu0
      %v951 = vadd.f32 %v765, %v950
      %v952 = vpop.f32.mrb[0].mxu0
      %953 = vmatprep.mubr.f32.mxu0 0.0
      %954 = vmatmul.mubr.f32.gmra.mrb[0].mxu0 %v784
      %v955 = vpop.f32.mrb[0].mxu0
      %v956 = vadd.f32 %v765, %v955
      %v957 = vpop.f32.mrb[0].mxu0
      %958 = vmatprep.mubr.f32.mxu0 0.0
      %959 = vmatmul.mubr.f32.gmra.mrb[0].mxu0 %v787
      %v960 = vpop.f32.mrb[0].mxu0
      %v961 = vadd.f32 %v765, %v960
      %v962 = vpop.f32.mrb[0].mxu0
      %963 = vmatprep.mubr.f32.mxu0 0.0
      %964 = vmatmul.mubr.f32.gmra.mrb[0].mxu0 %v790
      %v965 = vpop.f32.mrb[0].mxu0
      %v966 = vadd.f32 %v765, %v965
      %v967 = vpop.f32.mrb[0].mxu0
      %968 = vmatprep.mubr.f32.mxu0 0.0
      %969 = vmatmul.mubr.f32.gmra.mrb[0].mxu0 %v793
      %v970 = vpop.f32.mrb[0].mxu0
      %v971 = vadd.f32 %v765, %v970
      %v972 = vpop.f32.mrb[0].mxu0
      %973 = vmatprep.mubr.f32.mxu0 0.0
      %974 = vmatmul.mubr.f32.gmra.mrb[0].mxu0 %v796
      %v975 = vpop.f32.mrb[0].mxu0
      %v976 = vadd.f32 %v765, %v975
      %v977 = vpop.f32.mrb[0].mxu0
      %978 = vmatprep.mubr.f32.mxu0 0.0
      %979 = vmatmul.mubr.f32.gmra.mrb[0].mxu0 %v799
      %v980 = vpop.f32.mrb[0].mxu0
      %v981 = vadd.f32 %v765, %v980
      %v982 = vpop.f32.mrb[0].mxu0
      %983 = vmatprep.mubr.f32.mxu0 0.0
      %984 = vmatmul.mubr.f32.gmra.mrb[0].mxu0 %v802
      %v985 = vpop.f32.mrb[0].mxu0
      %v986 = vadd.f32 %v765, %v985
      %v987 = vpop.f32.mrb[0].mxu0
      %988 = vmatprep.mubr.f32.mxu0 0.0
      %989 = vmatmul.mubr.f32.gmra.mrb[0].mxu0 %v805
      %v990 = vpop.f32.mrb[0].mxu0
      %v991 = vadd.f32 %v765, %v990
      %v992 = vpop.f32.mrb[0].mxu0
      %993 = vmatprep.mubr.f32.mxu0 0.0
      %994 = vmatmul.mubr.f32.gmra.mrb[0].mxu0 %v808
      %v995 = vpop.f32.mrb[0].mxu0
      %v996 = vadd.f32 %v765, %v995
      %v997 = vpop.f32.mrb[0].mxu0
      %998 = vmatprep.mubr.f32.mxu0 0.0
      %999 = vmatmul.mubr.f32.gmra.mrb[0].mxu0 %v811
      %v1000 = vpop.f32.mrb[0].mxu0
      %v1001 = vadd.f32 %v765, %v1000
      %v1002 = vpop.f32.mrb[0].mxu0
      %1003 = vmatprep.mubr.f32.mxu0 0.0
      %1004 = vmatmul.mubr.f32.gmra.mrb[0].mxu0 %v814
      %v1005 = vpop.f32.mrb[0].mxu0
      %v1006 = vadd.f32 %v765, %v1005
      %v1007 = vpop.f32.mrb[0].mxu0
      %1008 = vmatprep.mubr.f32.mxu0 0.0
      %1009 = vmatmul.mubr.f32.gmra.mrb[0].mxu0 %v817
      %v1010 = vpop.f32.mrb[0].mxu0
      %v1011 = vadd.f32 %v765, %v1010
      %v1012 = vpop.f32.mrb[0].mxu0
      %1013 = vmatprep.mubr.f32.mxu0 0.0
      %1014 = vmatmul.mubr.f32.gmra.mrb[0].mxu0 %v820
      %v1015 = vpop.f32.mrb[0].mxu0
      %v1016 = vadd.f32 %v765, %v1015
      %v1017 = vpop.f32.mrb[0].mxu0
      %1018 = vmatprep.mubr.f32.mxu0 0.0
      %1019 = vmatmul.mubr.f32.gmra.mrb[0].mxu0 %v823
      %v1020 = vpop.f32.mrb[0].mxu0
      %v1021 = vadd.f32 %v765, %v1020
      %v1022 = vpop.f32.mrb[0].mxu0
      %1023 = vmatprep.mubr.f32.mxu0 0.0
      %1024 = vmatmul.mubr.f32.gmra.mrb[0].mxu0 %v826
      %v1025 = vpop.f32.mrb[0].mxu0
      %v1026 = vadd.f32 %v765, %v1025
      %v1027 = vpop.f32.mrb[0].mxu0
      %1028 = vmatprep.mubr.f32.mxu0 0.0
      %1029 = vmatmul.mubr.f32.gmra.mrb[0].mxu0 %v829
      %v1030 = vpop.f32.mrb[0].mxu0
      %v1031 = vadd.f32 %v765, %v1030
      %v1032 = vpop.f32.mrb[0].mxu0
      %1033 = vmatprep.mubr.f32.mxu0 0.0
      %1034 = vmatmul.mubr.f32.gmra.mrb[0].mxu0 %v832
      %v1035 = vpop.f32.mrb[0].mxu0
      %v1036 = vadd.f32 %v765, %v1035
      %v1037 = vpop.f32.mrb[0].mxu0
      %1038 = vmatprep.mubr.f32.mxu0 0.0
      %1039 = vmatmul.mubr.f32.gmra.mrb[0].mxu0 %v835
      %v1040 = vpop.f32.mrb[0].mxu0
      %v1041 = vadd.f32 %v765, %v1040
      %v1042 = vpop.f32.mrb[0].mxu0
      %1043 = vmatprep.mubr.f32.mxu0 0.0
      %1044 = vmatmul.mubr.f32.gmra.mrb[0].mxu0 %v838
      %v1045 = vpop.f32.mrb[0].mxu0
      %v1046 = vadd.f32 %v765, %v1045
      %v1047 = vpop.f32.mrb[0].mxu0
      %1048 = vmatprep.mubr.f32.mxu0 0.0
      %1049 = vmatmul.mubr.f32.gmra.mrb[0].mxu0 %v841
      %v1050 = vpop.f32.mrb[0].mxu0
      %v1051 = vadd.f32 %v765, %v1050
      %v1052 = vpop.f32.mrb[0].mxu0
      %1053 = vmatprep.mubr.f32.mxu0 0.0
      %1054 = vmatmul.mubr.f32.gmra.mrb[0].mxu0 %v844
      %v1055 = vpop.f32.mrb[0].mxu0
      %v1056 = vadd.f32 %v765, %v1055
      %v1057 = vpop.f32.mrb[0].mxu0
      %1058 = vmatprep.mubr.f32.mxu0 0.0
      %1059 = vmatmul.mubr.f32.gmra.mrb[0].mxu0 %v847
      %v1060 = vpop.f32.mrb[0].mxu0
      %v1061 = vadd.f32 %v765, %v1060
      %v1062 = vpop.f32.mrb[0].mxu0
      %1063 = vmatprep.mubr.f32.mxu0 0.0
      %1064 = vmatmul.mubr.f32.gmra.mrb[0].mxu0 %v850
      %v1065 = vpop.f32.mrb[0].mxu0
      %v1066 = vadd.f32 %v765, %v1065
      %v1067 = vpop.f32.mrb[0].mxu0
      %1068 = vmatprep.mubr.f32.mxu0 0.0
      %1069 = vmatmul.mubr.f32.gmra.mrb[0].mxu0 %v853
      %v1070 = vpop.f32.mrb[0].mxu0
      %v1071 = vadd.f32 %v765, %v1070
      %v1072 = vpop.f32.mrb[0].mxu0
      %1073 = vmatprep.mubr.f32.mxu0 0.0
      %1074 = vmatmul.mubr.f32.gmra.mrb[0].mxu0 %v856
      %v1075 = vpop.f32.mrb[0].mxu0
      %v1076 = vadd.f32 %v765, %v1075
      %v1077 = vpop.f32.mrb[0].mxu0
      %1078 = vmatprep.mubr.f32.mxu0 0.0
      %1079 = vmatmul.mubr.f32.gmra.mrb[0].mxu0 %v859
      %v1080 = vpop.f32.mrb[0].mxu0
      %v1081 = vadd.f32 %v765, %v1080
      %v1082 = vpop.f32.mrb[0].mxu0
      %1083 = vmatprep.mubr.f32.mxu0 0.0
      %1084 = vmatmul.mubr.f32.gmra.mrb[0].mxu0 %v862
      %v1085 = vpop.f32.mrb[0].mxu0
      %v1086 = vadd.f32 %v765, %v1085
      %v1087 = vpop.f32.mrb[0].mxu0
      %1088 = vdwg.mxu0
      %v1089 = vld [vmem:[#allocation2] sm:$0xff]
      %v1090 = vld [vmem:[#allocation2 + $0x8] sm:$0xff]
      %v1091 = vld [vmem:[#allocation2 + $0x10] sm:$0xff]
      %v1092 = vld [vmem:[#allocation2 + $0x18] sm:$0xff]
      %v1093 = vld [vmem:[#allocation2 + $0x20] sm:$0xff]
      %v1094 = vld [vmem:[#allocation2 + $0x28] sm:$0xff]
      %v1095 = vld [vmem:[#allocation2 + $0x30] sm:$0xff]
      %v1096 = vld [vmem:[#allocation2 + $0x38] sm:$0xff]
      %v1097 = vld [vmem:[#allocation2 + $0x40] sm:$0xff]
      %v1098 = vld [vmem:[#allocation2 + $0x48] sm:$0xff]
      %v1099 = vld [vmem:[#allocation2 + $0x50] sm:$0xff]
      %v1100 = vld [vmem:[#allocation2 + $0x58] sm:$0xff]
      %v1101 = vld [vmem:[#allocation2 + $0x60] sm:$0xff]
      %v1102 = vld [vmem:[#allocation2 + $0x68] sm:$0xff]
      %v1103 = vld [vmem:[#allocation2 + $0x70] sm:$0xff]
      %v1104 = vld [vmem:[#allocation2 + $0x78] sm:$0xff]
      %v1105 = vld [vmem:[#allocation2 + $0x80] sm:$0xff]
      %v1106 = vld [vmem:[#allocation2 + $0x88] sm:$0xff]
      %v1107 = vld [vmem:[#allocation2 + $0x90] sm:$0xff]
      %v1108 = vld [vmem:[#allocation2 + $0x98] sm:$0xff]
      %v1109 = vld [vmem:[#allocation2 + $0xa0] sm:$0xff]
      %v1110 = vld [vmem:[#allocation2 + $0xa8] sm:$0xff]
      %v1111 = vld [vmem:[#allocation2 + $0xb0] sm:$0xff]
      %v1112 = vld [vmem:[#allocation2 + $0xb8] sm:$0xff]
      %v1113 = vld [vmem:[#allocation2 + $0xc0] sm:$0xff]
      %v1114 = vld [vmem:[#allocation2 + $0xc8] sm:$0xff]
      %v1115 = vld [vmem:[#allocation2 + $0xd0] sm:$0xff]
      %v1116 = vld [vmem:[#allocation2 + $0xd8] sm:$0xff]
      %v1117 = vld [vmem:[#allocation2 + $0xe0] sm:$0xff]
      %v1118 = vld [vmem:[#allocation2 + $0xe8] sm:$0xff]
      %v1119 = vld [vmem:[#allocation2 + $0xf0] sm:$0xff]
      %v1120 = vld [vmem:[#allocation2 + $0xf8] sm:$0xff]
      %v1121 = vpack.c.bf16 %v1090, %v1089
      %v1122 = vpack.c.bf16 %v1092, %v1091
      %v1123 = vpack.c.bf16 %v1094, %v1093
      %v1124 = vpack.c.bf16 %v1096, %v1095
      %v1125 = vpack.c.bf16 %v1098, %v1097
      %v1126 = vpack.c.bf16 %v1100, %v1099
      %v1127 = vpack.c.bf16 %v1102, %v1101
      %v1128 = vpack.c.bf16 %v1104, %v1103
      %v1129 = vpack.c.bf16 %v1106, %v1105
      %v1130 = vpack.c.bf16 %v1108, %v1107
      %v1131 = vpack.c.bf16 %v1110, %v1109
      %v1132 = vpack.c.bf16 %v1112, %v1111
      %v1133 = vpack.c.bf16 %v1114, %v1113
      %v1134 = vpack.c.bf16 %v1116, %v1115
      %v1135 = vpack.c.bf16 %v1118, %v1117
      %v1136 = vpack.c.bf16 %v1120, %v1119
      %v1137 = vpack.c.bf16 %v936, %v931
      %v1138 = vpack.c.bf16 %v946, %v941
      %v1139 = vpack.c.bf16 %v956, %v951
      %v1140 = vpack.c.bf16 %v966, %v961
      %v1141 = vpack.c.bf16 %v976, %v971
      %v1142 = vpack.c.bf16 %v986, %v981
      %v1143 = vpack.c.bf16 %v996, %v991
      %v1144 = vpack.c.bf16 %v1006, %v1001
      %v1145 = vpack.c.bf16 %v1016, %v1011
      %v1146 = vpack.c.bf16 %v1026, %v1021
      %v1147 = vpack.c.bf16 %v1036, %v1031
      %v1148 = vpack.c.bf16 %v1046, %v1041
      %v1149 = vpack.c.bf16 %v1056, %v1051
      %v1150 = vpack.c.bf16 %v1066, %v1061
      %v1151 = vpack.c.bf16 %v1076, %v1071
      %v1152 = vpack.c.bf16 %v1086, %v1081
      %vm1153 = vcmask 130048
      %v1155 = vsel %vm1153, %v1121, 0
      %v1158 = vsel %vm1153, %v1122, 0
      %v1161 = vsel %vm1153, %v1123, 0
      %v1164 = vsel %vm1153, %v1124, 0
      %v1167 = vsel %vm1153, %v1125, 0
      %v1170 = vsel %vm1153, %v1126, 0
      %v1173 = vsel %vm1153, %v1127, 0
      %v1176 = vsel %vm1153, %v1128, 0
      %v1179 = vsel %vm1153, %v1129, 0
      %v1182 = vsel %vm1153, %v1130, 0
      %v1185 = vsel %vm1153, %v1131, 0
      %v1188 = vsel %vm1153, %v1132, 0
      %v1191 = vsel %vm1153, %v1133, 0
      %v1194 = vsel %vm1153, %v1134, 0
      %v1197 = vsel %vm1153, %v1135, 0
      %v1200 = vsel %vm1153, %v1136, 0
      %v1203 = vsel %vm1153, %v1137, 0
      %v1206 = vsel %vm1153, %v1138, 0
      %v1209 = vsel %vm1153, %v1139, 0
      %v1212 = vsel %vm1153, %v1140, 0
      %v1215 = vsel %vm1153, %v1141, 0
      %v1218 = vsel %vm1153, %v1142, 0
      %v1221 = vsel %vm1153, %v1143, 0
      %v1224 = vsel %vm1153, %v1144, 0
      %v1227 = vsel %vm1153, %v1145, 0
      %v1230 = vsel %vm1153, %v1146, 0
      %v1233 = vsel %vm1153, %v1147, 0
      %v1236 = vsel %vm1153, %v1148, 0
      %v1239 = vsel %vm1153, %v1149, 0
      %v1242 = vsel %vm1153, %v1150, 0
      %v1245 = vsel %vm1153, %v1151, 0
      %v1248 = vsel %vm1153, %v1152, 0
      %1250 = vmatprep.subr.bf16.mxu0 0
      %1251 = vmatpush1.bf16.xpose.msra.mxu0 %v1203
      %1252 = vmatprep.subr.bf16.mxu0 0
      %1253 = vmatpush1.bf16.xpose.msra.mxu0 %v1206
      %1254 = vmatprep.subr.bf16.mxu0 0
      %1255 = vmatpush1.bf16.xpose.msra.mxu0 %v1209
      %1256 = vmatprep.subr.bf16.mxu0 0
      %1257 = vmatpush1.bf16.xpose.msra.mxu0 %v1212
      %1258 = vmatprep.subr.bf16.mxu0 0
      %1259 = vmatpush1.bf16.xpose.msra.mxu0 %v1215
      %1260 = vmatprep.subr.bf16.mxu0 0
      %1261 = vmatpush1.bf16.xpose.msra.mxu0 %v1218
      %1262 = vmatprep.subr.bf16.mxu0 0
      %1263 = vmatpush1.bf16.xpose.msra.mxu0 %v1221
      %1264 = vmatprep.subr.bf16.mxu0 0
      %1265 = vmatpush1.bf16.xpose.msra.mxu0 %v1224
      %1266 = vmatprep.subr.bf16.mxu0 0
      %1267 = vmatpush1.bf16.xpose.msra.mxu0 %v1227
      %1268 = vmatprep.subr.bf16.mxu0 0
      %1269 = vmatpush1.bf16.xpose.msra.mxu0 %v1230
      %1270 = vmatprep.subr.bf16.mxu0 0
      %1271 = vmatpush1.bf16.xpose.msra.mxu0 %v1233
      %1272 = vmatprep.subr.bf16.mxu0 0
      %1273 = vmatpush1.bf16.xpose.msra.mxu0 %v1236
      %1274 = vmatprep.subr.bf16.mxu0 0
      %1275 = vmatpush1.bf16.xpose.msra.mxu0 %v1239
      %1276 = vmatprep.subr.bf16.mxu0 0
      %1277 = vmatpush1.bf16.xpose.msra.mxu0 %v1242
      %1278 = vmatprep.subr.bf16.mxu0 0
      %1279 = vmatpush1.bf16.xpose.msra.mxu0 %v1245
      %1280 = vmatprep.subr.bf16.mxu0 0
      %1281 = vmatpush1.bf16.xpose.msra.mxu0 %v1248
      %1282 = vmatprep.mubr.bf16.mxu0 0
      %1283 = vmatmul.mubr.bf16.gmra.mrb[0].mxu0 %v1155
      %v1284 = vpop.f32.mrb[0].mxu0
      %v1285 = vadd.f32 0.0, %v1284
      %v1286 = vpop.f32.mrb[0].mxu0
      %v1287 = vadd.f32 0.0, %v1286
      %v1288 = vpop.f32.mrb[0].mxu0
      %v1289 = vadd.f32 0.0, %v1288
      %v1290 = vpop.f32.mrb[0].mxu0
      %v1291 = vadd.f32 0.0, %v1290
      %1292 = vmatprep.mubr.bf16.mxu0 0
      %1293 = vmatmul.mubr.bf16.gmra.mrb[0].mxu0 %v1158
      %v1294 = vpop.f32.mrb[0].mxu0
      %v1295 = vadd.f32 0.0, %v1294
      %v1296 = vpop.f32.mrb[0].mxu0
      %v1297 = vadd.f32 0.0, %v1296
      %v1298 = vpop.f32.mrb[0].mxu0
      %v1299 = vadd.f32 0.0, %v1298
      %v1300 = vpop.f32.mrb[0].mxu0
      %v1301 = vadd.f32 0.0, %v1300
      %1302 = vmatprep.mubr.bf16.mxu0 0
      %1303 = vmatmul.mubr.bf16.gmra.mrb[0].mxu0 %v1161
      %v1304 = vpop.f32.mrb[0].mxu0
      %v1305 = vadd.f32 0.0, %v1304
      %v1306 = vpop.f32.mrb[0].mxu0
      %v1307 = vadd.f32 0.0, %v1306
      %v1308 = vpop.f32.mrb[0].mxu0
      %v1309 = vadd.f32 0.0, %v1308
      %v1310 = vpop.f32.mrb[0].mxu0
      %v1311 = vadd.f32 0.0, %v1310
      %1312 = vmatprep.mubr.bf16.mxu0 0
      %1313 = vmatmul.mubr.bf16.gmra.mrb[0].mxu0 %v1164
      %v1314 = vpop.f32.mrb[0].mxu0
      %v1315 = vadd.f32 0.0, %v1314
      %v1316 = vpop.f32.mrb[0].mxu0
      %v1317 = vadd.f32 0.0, %v1316
      %v1318 = vpop.f32.mrb[0].mxu0
      %v1319 = vadd.f32 0.0, %v1318
      %v1320 = vpop.f32.mrb[0].mxu0
      %v1321 = vadd.f32 0.0, %v1320
      %1322 = vmatprep.mubr.bf16.mxu0 0
      %1323 = vmatmul.mubr.bf16.gmra.mrb[0].mxu0 %v1167
      %v1324 = vpop.f32.mrb[0].mxu0
      %v1325 = vadd.f32 0.0, %v1324
      %v1326 = vpop.f32.mrb[0].mxu0
      %v1327 = vadd.f32 0.0, %v1326
      %v1328 = vpop.f32.mrb[0].mxu0
      %v1329 = vadd.f32 0.0, %v1328
      %v1330 = vpop.f32.mrb[0].mxu0
      %v1331 = vadd.f32 0.0, %v1330
      %1332 = vmatprep.mubr.bf16.mxu0 0
      %1333 = vmatmul.mubr.bf16.gmra.mrb[0].mxu0 %v1170
      %v1334 = vpop.f32.mrb[0].mxu0
      %v1335 = vadd.f32 0.0, %v1334
      %v1336 = vpop.f32.mrb[0].mxu0
      %v1337 = vadd.f32 0.0, %v1336
      %v1338 = vpop.f32.mrb[0].mxu0
      %v1339 = vadd.f32 0.0, %v1338
      %v1340 = vpop.f32.mrb[0].mxu0
      %v1341 = vadd.f32 0.0, %v1340
      %1342 = vmatprep.mubr.bf16.mxu0 0
      %1343 = vmatmul.mubr.bf16.gmra.mrb[0].mxu0 %v1173
      %v1344 = vpop.f32.mrb[0].mxu0
      %v1345 = vadd.f32 0.0, %v1344
      %v1346 = vpop.f32.mrb[0].mxu0
      %v1347 = vadd.f32 0.0, %v1346
      %v1348 = vpop.f32.mrb[0].mxu0
      %v1349 = vadd.f32 0.0, %v1348
      %v1350 = vpop.f32.mrb[0].mxu0
      %v1351 = vadd.f32 0.0, %v1350
      %1352 = vmatprep.mubr.bf16.mxu0 0
      %1353 = vmatmul.mubr.bf16.gmra.mrb[0].mxu0 %v1176
      %v1354 = vpop.f32.mrb[0].mxu0
      %v1355 = vadd.f32 0.0, %v1354
      %v1356 = vpop.f32.mrb[0].mxu0
      %v1357 = vadd.f32 0.0, %v1356
      %v1358 = vpop.f32.mrb[0].mxu0
      %v1359 = vadd.f32 0.0, %v1358
      %v1360 = vpop.f32.mrb[0].mxu0
      %v1361 = vadd.f32 0.0, %v1360
      %1362 = vmatprep.mubr.bf16.mxu0 0
      %1363 = vmatmul.mubr.bf16.gmra.mrb[0].mxu0 %v1179
      %v1364 = vpop.f32.mrb[0].mxu0
      %v1365 = vadd.f32 0.0, %v1364
      %v1366 = vpop.f32.mrb[0].mxu0
      %v1367 = vadd.f32 0.0, %v1366
      %v1368 = vpop.f32.mrb[0].mxu0
      %v1369 = vadd.f32 0.0, %v1368
      %v1370 = vpop.f32.mrb[0].mxu0
      %v1371 = vadd.f32 0.0, %v1370
      %1372 = vmatprep.mubr.bf16.mxu0 0
      %1373 = vmatmul.mubr.bf16.gmra.mrb[0].mxu0 %v1182
      %v1374 = vpop.f32.mrb[0].mxu0
      %v1375 = vadd.f32 0.0, %v1374
      %v1376 = vpop.f32.mrb[0].mxu0
      %v1377 = vadd.f32 0.0, %v1376
      %v1378 = vpop.f32.mrb[0].mxu0
      %v1379 = vadd.f32 0.0, %v1378
      %v1380 = vpop.f32.mrb[0].mxu0
      %v1381 = vadd.f32 0.0, %v1380
      %1382 = vmatprep.mubr.bf16.mxu0 0
      %1383 = vmatmul.mubr.bf16.gmra.mrb[0].mxu0 %v1185
      %v1384 = vpop.f32.mrb[0].mxu0
      %v1385 = vadd.f32 0.0, %v1384
      %v1386 = vpop.f32.mrb[0].mxu0
      %v1387 = vadd.f32 0.0, %v1386
      %v1388 = vpop.f32.mrb[0].mxu0
      %v1389 = vadd.f32 0.0, %v1388
      %v1390 = vpop.f32.mrb[0].mxu0
      %v1391 = vadd.f32 0.0, %v1390
      %1392 = vmatprep.mubr.bf16.mxu0 0
      %1393 = vmatmul.mubr.bf16.gmra.mrb[0].mxu0 %v1188
      %v1394 = vpop.f32.mrb[0].mxu0
      %v1395 = vadd.f32 0.0, %v1394
      %v1396 = vpop.f32.mrb[0].mxu0
      %v1397 = vadd.f32 0.0, %v1396
      %v1398 = vpop.f32.mrb[0].mxu0
      %v1399 = vadd.f32 0.0, %v1398
      %v1400 = vpop.f32.mrb[0].mxu0
      %v1401 = vadd.f32 0.0, %v1400
      %1402 = vmatprep.mubr.bf16.mxu0 0
      %1403 = vmatmul.mubr.bf16.gmra.mrb[0].mxu0 %v1191
      %v1404 = vpop.f32.mrb[0].mxu0
      %v1405 = vadd.f32 0.0, %v1404
      %v1406 = vpop.f32.mrb[0].mxu0
      %v1407 = vadd.f32 0.0, %v1406
      %v1408 = vpop.f32.mrb[0].mxu0
      %v1409 = vadd.f32 0.0, %v1408
      %v1410 = vpop.f32.mrb[0].mxu0
      %v1411 = vadd.f32 0.0, %v1410
      %1412 = vmatprep.mubr.bf16.mxu0 0
      %1413 = vmatmul.mubr.bf16.gmra.mrb[0].mxu0 %v1194
      %v1414 = vpop.f32.mrb[0].mxu0
      %v1415 = vadd.f32 0.0, %v1414
      %v1416 = vpop.f32.mrb[0].mxu0
      %v1417 = vadd.f32 0.0, %v1416
      %v1418 = vpop.f32.mrb[0].mxu0
      %v1419 = vadd.f32 0.0, %v1418
      %v1420 = vpop.f32.mrb[0].mxu0
      %v1421 = vadd.f32 0.0, %v1420
      %1422 = vmatprep.mubr.bf16.mxu0 0
      %1423 = vmatmul.mubr.bf16.gmra.mrb[0].mxu0 %v1197
      %v1424 = vpop.f32.mrb[0].mxu0
      %v1425 = vadd.f32 0.0, %v1424
      %v1426 = vpop.f32.mrb[0].mxu0
      %v1427 = vadd.f32 0.0, %v1426
      %v1428 = vpop.f32.mrb[0].mxu0
      %v1429 = vadd.f32 0.0, %v1428
      %v1430 = vpop.f32.mrb[0].mxu0
      %v1431 = vadd.f32 0.0, %v1430
      %1432 = vmatprep.mubr.bf16.mxu0 0
      %1433 = vmatmul.mubr.bf16.gmra.mrb[0].mxu0 %v1200
      %v1434 = vpop.f32.mrb[0].mxu0
      %v1435 = vadd.f32 0.0, %v1434
      %v1436 = vpop.f32.mrb[0].mxu0
      %v1437 = vadd.f32 0.0, %v1436
      %v1438 = vpop.f32.mrb[0].mxu0
      %v1439 = vadd.f32 0.0, %v1438
      %v1440 = vpop.f32.mrb[0].mxu0
      %v1441 = vadd.f32 0.0, %v1440
      %1442 = vdwg.mxu0
      %v1443 = vmul.f32 %v1285, 9.645062e-05
      %v1444 = vmul.f32 %v1287, 9.645062e-05
      %v1445 = vmul.f32 %v1289, 9.645062e-05
      %v1446 = vmul.f32 %v1291, 9.645062e-05
      %v1447 = vmul.f32 %v1295, 9.645062e-05
      %v1448 = vmul.f32 %v1297, 9.645062e-05
      %v1449 = vmul.f32 %v1299, 9.645062e-05
      %v1450 = vmul.f32 %v1301, 9.645062e-05
      %v1451 = vmul.f32 %v1305, 9.645062e-05
      %v1452 = vmul.f32 %v1307, 9.645062e-05
      %v1453 = vmul.f32 %v1309, 9.645062e-05
      %v1454 = vmul.f32 %v1311, 9.645062e-05
      %v1455 = vmul.f32 %v1315, 9.645062e-05
      %v1456 = vmul.f32 %v1317, 9.645062e-05
      %v1457 = vmul.f32 %v1319, 9.645062e-05
      %v1458 = vmul.f32 %v1321, 9.645062e-05
      %v1459 = vmul.f32 %v1325, 9.645062e-05
      %v1460 = vmul.f32 %v1327, 9.645062e-05
      %v1461 = vmul.f32 %v1329, 9.645062e-05
      %v1462 = vmul.f32 %v1331, 9.645062e-05
      %v1463 = vmul.f32 %v1335, 9.645062e-05
      %v1464 = vmul.f32 %v1337, 9.645062e-05
      %v1465 = vmul.f32 %v1339, 9.645062e-05
      %v1466 = vmul.f32 %v1341, 9.645062e-05
      %v1467 = vmul.f32 %v1345, 9.645062e-05
      %v1468 = vmul.f32 %v1347, 9.645062e-05
      %v1469 = vmul.f32 %v1349, 9.645062e-05
      %v1470 = vmul.f32 %v1351, 9.645062e-05
      %v1471 = vmul.f32 %v1355, 9.645062e-05
      %v1472 = vmul.f32 %v1357, 9.645062e-05
      %v1473 = vmul.f32 %v1359, 9.645062e-05
      %v1474 = vmul.f32 %v1361, 9.645062e-05
      %v1475 = vmul.f32 %v1365, 9.645062e-05
      %v1476 = vmul.f32 %v1367, 9.645062e-05
      %v1477 = vmul.f32 %v1369, 9.645062e-05
      %v1478 = vmul.f32 %v1371, 9.645062e-05
      %v1479 = vmul.f32 %v1375, 9.645062e-05
      %v1480 = vmul.f32 %v1377, 9.645062e-05
      %v1481 = vmul.f32 %v1379, 9.645062e-05
      %v1482 = vmul.f32 %v1381, 9.645062e-05
      %v1483 = vmul.f32 %v1385, 9.645062e-05
      %v1484 = vmul.f32 %v1387, 9.645062e-05
      %v1485 = vmul.f32 %v1389, 9.645062e-05
      %v1486 = vmul.f32 %v1391, 9.645062e-05
      %v1487 = vmul.f32 %v1395, 9.645062e-05
      %v1488 = vmul.f32 %v1397, 9.645062e-05
      %v1489 = vmul.f32 %v1399, 9.645062e-05
      %v1490 = vmul.f32 %v1401, 9.645062e-05
      %v1491 = vmul.f32 %v1405, 9.645062e-05
      %v1492 = vmul.f32 %v1407, 9.645062e-05
      %v1493 = vmul.f32 %v1409, 9.645062e-05
      %v1494 = vmul.f32 %v1411, 9.645062e-05
      %v1495 = vmul.f32 %v1415, 9.645062e-05
      %v1496 = vmul.f32 %v1417, 9.645062e-05
      %v1497 = vmul.f32 %v1419, 9.645062e-05
      %v1498 = vmul.f32 %v1421, 9.645062e-05
      %v1499 = vmul.f32 %v1425, 9.645062e-05
      %v1500 = vmul.f32 %v1427, 9.645062e-05
      %v1501 = vmul.f32 %v1429, 9.645062e-05
      %v1502 = vmul.f32 %v1431, 9.645062e-05
      %v1503 = vmul.f32 %v1435, 9.645062e-05
      %v1504 = vmul.f32 %v1437, 9.645062e-05
      %v1505 = vmul.f32 %v1439, 9.645062e-05
      %v1506 = vmul.f32 %v1441, 9.645062e-05
      %v1507 = vld [vmem:[#allocation3] sm:$0xff]
      %v1508 = vld [vmem:[#allocation3 + $0x8] sm:$0xff]
      %v1509 = vld [vmem:[#allocation3 + $0x10] sm:$0xff]
      %v1510 = vld [vmem:[#allocation3 + $0x18] sm:$0xff]
      %v1511 = vld [vmem:[#allocation3 + $0x20] sm:$0xff]
      %v1512 = vld [vmem:[#allocation3 + $0x28] sm:$0xff]
      %v1513 = vld [vmem:[#allocation3 + $0x30] sm:$0xff]
      %v1514 = vld [vmem:[#allocation3 + $0x38] sm:$0xff]
      %v1515 = vld [vmem:[#allocation3 + $0x40] sm:$0xff]
      %v1516 = vld [vmem:[#allocation3 + $0x48] sm:$0xff]
      %v1517 = vld [vmem:[#allocation3 + $0x50] sm:$0xff]
      %v1518 = vld [vmem:[#allocation3 + $0x58] sm:$0xff]
      %v1519 = vld [vmem:[#allocation3 + $0x60] sm:$0xff]
      %v1520 = vld [vmem:[#allocation3 + $0x68] sm:$0xff]
      %v1521 = vld [vmem:[#allocation3 + $0x70] sm:$0xff]
      %v1522 = vld [vmem:[#allocation3 + $0x78] sm:$0xff]
      %v1523 = vld [vmem:[#allocation3 + $0x80] sm:$0xff]
      %v1524 = vld [vmem:[#allocation3 + $0x88] sm:$0xff]
      %v1525 = vld [vmem:[#allocation3 + $0x90] sm:$0xff]
      %v1526 = vld [vmem:[#allocation3 + $0x98] sm:$0xff]
      %v1527 = vld [vmem:[#allocation3 + $0xa0] sm:$0xff]
      %v1528 = vld [vmem:[#allocation3 + $0xa8] sm:$0xff]
      %v1529 = vld [vmem:[#allocation3 + $0xb0] sm:$0xff]
      %v1530 = vld [vmem:[#allocation3 + $0xb8] sm:$0xff]
      %v1531 = vld [vmem:[#allocation3 + $0xc0] sm:$0xff]
      %v1532 = vld [vmem:[#allocation3 + $0xc8] sm:$0xff]
      %v1533 = vld [vmem:[#allocation3 + $0xd0] sm:$0xff]
      %v1534 = vld [vmem:[#allocation3 + $0xd8] sm:$0xff]
      %v1535 = vld [vmem:[#allocation3 + $0xe0] sm:$0xff]
      %v1536 = vld [vmem:[#allocation3 + $0xe8] sm:$0xff]
      %v1537 = vld [vmem:[#allocation3 + $0xf0] sm:$0xff]
      %v1538 = vld [vmem:[#allocation3 + $0xf8] sm:$0xff]
      %v1539 = vpack.c.bf16 %v1445, %v1443
      %v1540 = vpack.c.bf16 %v1446, %v1444
      %v1541 = vpack.c.bf16 %v1449, %v1447
      %v1542 = vpack.c.bf16 %v1450, %v1448
      %v1543 = vpack.c.bf16 %v1453, %v1451
      %v1544 = vpack.c.bf16 %v1454, %v1452
      %v1545 = vpack.c.bf16 %v1457, %v1455
      %v1546 = vpack.c.bf16 %v1458, %v1456
      %v1547 = vpack.c.bf16 %v1461, %v1459
      %v1548 = vpack.c.bf16 %v1462, %v1460
      %v1549 = vpack.c.bf16 %v1465, %v1463
      %v1550 = vpack.c.bf16 %v1466, %v1464
      %v1551 = vpack.c.bf16 %v1469, %v1467
      %v1552 = vpack.c.bf16 %v1470, %v1468
      %v1553 = vpack.c.bf16 %v1473, %v1471
      %v1554 = vpack.c.bf16 %v1474, %v1472
      %v1555 = vpack.c.bf16 %v1477, %v1475
      %v1556 = vpack.c.bf16 %v1478, %v1476
      %v1557 = vpack.c.bf16 %v1481, %v1479
      %v1558 = vpack.c.bf16 %v1482, %v1480
      %v1559 = vpack.c.bf16 %v1485, %v1483
      %v1560 = vpack.c.bf16 %v1486, %v1484
      %v1561 = vpack.c.bf16 %v1489, %v1487
      %v1562 = vpack.c.bf16 %v1490, %v1488
      %v1563 = vpack.c.bf16 %v1493, %v1491
      %v1564 = vpack.c.bf16 %v1494, %v1492
      %v1565 = vpack.c.bf16 %v1497, %v1495
      %v1566 = vpack.c.bf16 %v1498, %v1496
      %v1567 = vpack.c.bf16 %v1501, %v1499
      %v1568 = vpack.c.bf16 %v1502, %v1500
      %v1569 = vpack.c.bf16 %v1505, %v1503
      %v1570 = vpack.c.bf16 %v1506, %v1504
      %v1571 = vpack.c.bf16 %v725, %v724
      %v1572 = vpack.c.bf16 %v727, %v726
      %v1573 = vpack.c.bf16 %v729, %v728
      %v1574 = vpack.c.bf16 %v731, %v730
      %v1575 = vpack.c.bf16 %v733, %v732
      %v1576 = vpack.c.bf16 %v735, %v734
      %v1577 = vpack.c.bf16 %v737, %v736
      %v1578 = vpack.c.bf16 %v739, %v738
      %v1579 = vpack.c.bf16 %v741, %v740
      %v1580 = vpack.c.bf16 %v743, %v742
      %v1581 = vpack.c.bf16 %v745, %v744
      %v1582 = vpack.c.bf16 %v747, %v746
      %v1583 = vpack.c.bf16 %v749, %v748
      %v1584 = vpack.c.bf16 %v751, %v750
      %v1585 = vpack.c.bf16 %v753, %v752
      %v1586 = vpack.c.bf16 %v755, %v754
      %1587 = vmatprep.subr.bf16.mxu0 0
      %1588 = vmatpush1.bf16.msra.mxu0 %v1571
      %1589 = vmatprep.subr.bf16.mxu0 0
      %1590 = vmatpush1.bf16.msra.mxu0 %v1572
      %1591 = vmatprep.subr.bf16.mxu0 0
      %1592 = vmatpush1.bf16.msra.mxu0 %v1573
      %1593 = vmatprep.subr.bf16.mxu0 0
      %1594 = vmatpush1.bf16.msra.mxu0 %v1574
      %1595 = vmatprep.subr.bf16.mxu0 0
      %1596 = vmatpush1.bf16.msra.mxu0 %v1575
      %1597 = vmatprep.subr.bf16.mxu0 0
      %1598 = vmatpush1.bf16.msra.mxu0 %v1576
      %1599 = vmatprep.subr.bf16.mxu0 0
      %1600 = vmatpush1.bf16.msra.mxu0 %v1577
      %1601 = vmatprep.subr.bf16.mxu0 0
      %1602 = vmatpush1.bf16.msra.mxu0 %v1578
      %1603 = vmatprep.subr.bf16.mxu0 0
      %1604 = vmatpush1.bf16.msra.mxu0 %v1579
      %1605 = vmatprep.subr.bf16.mxu0 0
      %1606 = vmatpush1.bf16.msra.mxu0 %v1580
      %1607 = vmatprep.subr.bf16.mxu0 0
      %1608 = vmatpush1.bf16.msra.mxu0 %v1581
      %1609 = vmatprep.subr.bf16.mxu0 0
      %1610 = vmatpush1.bf16.msra.mxu0 %v1582
      %1611 = vmatprep.subr.bf16.mxu0 0
      %1612 = vmatpush1.bf16.msra.mxu0 %v1583
      %1613 = vmatprep.subr.bf16.mxu0 0
      %1614 = vmatpush1.bf16.msra.mxu0 %v1584
      %1615 = vmatprep.subr.bf16.mxu0 0
      %1616 = vmatpush1.bf16.msra.mxu0 %v1585
      %1617 = vmatprep.subr.bf16.mxu0 0
      %1618 = vmatpush1.bf16.msra.mxu0 %v1586
      %1619 = vmatprep.mubr.bf16.mxu0 %v1540
      %1620 = vmatmul.mubr.bf16.gmra.mrb[0].mxu0 %v1539
      %v1621 = vpop.f32.mrb[0].mxu0
      %v1622 = vadd.f32 0.0, %v1621
      %v1623 = vpop.f32.mrb[0].mxu0
      %v1624 = vpop.f32.mrb[0].mxu0
      %v1625 = vadd.f32 0.0, %v1624
      %v1626 = vpop.f32.mrb[0].mxu0
      %1627 = vmatprep.mubr.bf16.mxu0 %v1542
      %1628 = vmatmul.mubr.bf16.gmra.mrb[0].mxu0 %v1541
      %v1629 = vpop.f32.mrb[0].mxu0
      %v1630 = vadd.f32 0.0, %v1629
      %v1631 = vpop.f32.mrb[0].mxu0
      %v1632 = vpop.f32.mrb[0].mxu0
      %v1633 = vadd.f32 0.0, %v1632
      %v1634 = vpop.f32.mrb[0].mxu0
      %1635 = vmatprep.mubr.bf16.mxu0 %v1544
      %1636 = vmatmul.mubr.bf16.gmra.mrb[0].mxu0 %v1543
      %v1637 = vpop.f32.mrb[0].mxu0
      %v1638 = vadd.f32 0.0, %v1637
      %v1639 = vpop.f32.mrb[0].mxu0
      %v1640 = vpop.f32.mrb[0].mxu0
      %v1641 = vadd.f32 0.0, %v1640
      %v1642 = vpop.f32.mrb[0].mxu0
      %1643 = vmatprep.mubr.bf16.mxu0 %v1546
      %1644 = vmatmul.mubr.bf16.gmra.mrb[0].mxu0 %v1545
      %v1645 = vpop.f32.mrb[0].mxu0
      %v1646 = vadd.f32 0.0, %v1645
      %v1647 = vpop.f32.mrb[0].mxu0
      %v1648 = vpop.f32.mrb[0].mxu0
      %v1649 = vadd.f32 0.0, %v1648
      %v1650 = vpop.f32.mrb[0].mxu0
      %1651 = vmatprep.mubr.bf16.mxu0 %v1548
      %1652 = vmatmul.mubr.bf16.gmra.mrb[0].mxu0 %v1547
      %v1653 = vpop.f32.mrb[0].mxu0
      %v1654 = vadd.f32 0.0, %v1653
      %v1655 = vpop.f32.mrb[0].mxu0
      %v1656 = vpop.f32.mrb[0].mxu0
      %v1657 = vadd.f32 0.0, %v1656
      %v1658 = vpop.f32.mrb[0].mxu0
      %1659 = vmatprep.mubr.bf16.mxu0 %v1550
      %1660 = vmatmul.mubr.bf16.gmra.mrb[0].mxu0 %v1549
      %v1661 = vpop.f32.mrb[0].mxu0
      %v1662 = vadd.f32 0.0, %v1661
      %v1663 = vpop.f32.mrb[0].mxu0
      %v1664 = vpop.f32.mrb[0].mxu0
      %v1665 = vadd.f32 0.0, %v1664
      %v1666 = vpop.f32.mrb[0].mxu0
      %1667 = vmatprep.mubr.bf16.mxu0 %v1552
      %1668 = vmatmul.mubr.bf16.gmra.mrb[0].mxu0 %v1551
      %v1669 = vpop.f32.mrb[0].mxu0
      %v1670 = vadd.f32 0.0, %v1669
      %v1671 = vpop.f32.mrb[0].mxu0
      %v1672 = vpop.f32.mrb[0].mxu0
      %v1673 = vadd.f32 0.0, %v1672
      %v1674 = vpop.f32.mrb[0].mxu0
      %1675 = vmatprep.mubr.bf16.mxu0 %v1554
      %1676 = vmatmul.mubr.bf16.gmra.mrb[0].mxu0 %v1553
      %v1677 = vpop.f32.mrb[0].mxu0
      %v1678 = vadd.f32 0.0, %v1677
      %v1679 = vpop.f32.mrb[0].mxu0
      %v1680 = vpop.f32.mrb[0].mxu0
      %v1681 = vadd.f32 0.0, %v1680
      %v1682 = vpop.f32.mrb[0].mxu0
      %1683 = vmatprep.mubr.bf16.mxu0 %v1556
      %1684 = vmatmul.mubr.bf16.gmra.mrb[0].mxu0 %v1555
      %v1685 = vpop.f32.mrb[0].mxu0
      %v1686 = vadd.f32 0.0, %v1685
      %v1687 = vpop.f32.mrb[0].mxu0
      %v1688 = vpop.f32.mrb[0].mxu0
      %v1689 = vadd.f32 0.0, %v1688
      %v1690 = vpop.f32.mrb[0].mxu0
      %1691 = vmatprep.mubr.bf16.mxu0 %v1558
      %1692 = vmatmul.mubr.bf16.gmra.mrb[0].mxu0 %v1557
      %v1693 = vpop.f32.mrb[0].mxu0
      %v1694 = vadd.f32 0.0, %v1693
      %v1695 = vpop.f32.mrb[0].mxu0
      %v1696 = vpop.f32.mrb[0].mxu0
      %v1697 = vadd.f32 0.0, %v1696
      %v1698 = vpop.f32.mrb[0].mxu0
      %1699 = vmatprep.mubr.bf16.mxu0 %v1560
      %1700 = vmatmul.mubr.bf16.gmra.mrb[0].mxu0 %v1559
      %v1701 = vpop.f32.mrb[0].mxu0
      %v1702 = vadd.f32 0.0, %v1701
      %v1703 = vpop.f32.mrb[0].mxu0
      %v1704 = vpop.f32.mrb[0].mxu0
      %v1705 = vadd.f32 0.0, %v1704
      %v1706 = vpop.f32.mrb[0].mxu0
      %1707 = vmatprep.mubr.bf16.mxu0 %v1562
      %1708 = vmatmul.mubr.bf16.gmra.mrb[0].mxu0 %v1561
      %v1709 = vpop.f32.mrb[0].mxu0
      %v1710 = vadd.f32 0.0, %v1709
      %v1711 = vpop.f32.mrb[0].mxu0
      %v1712 = vpop.f32.mrb[0].mxu0
      %v1713 = vadd.f32 0.0, %v1712
      %v1714 = vpop.f32.mrb[0].mxu0
      %1715 = vmatprep.mubr.bf16.mxu0 %v1564
      %1716 = vmatmul.mubr.bf16.gmra.mrb[0].mxu0 %v1563
      %v1717 = vpop.f32.mrb[0].mxu0
      %v1718 = vadd.f32 0.0, %v1717
      %v1719 = vpop.f32.mrb[0].mxu0
      %v1720 = vpop.f32.mrb[0].mxu0
      %v1721 = vadd.f32 0.0, %v1720
      %v1722 = vpop.f32.mrb[0].mxu0
      %1723 = vmatprep.mubr.bf16.mxu0 %v1566
      %1724 = vmatmul.mubr.bf16.gmra.mrb[0].mxu0 %v1565
      %v1725 = vpop.f32.mrb[0].mxu0
      %v1726 = vadd.f32 0.0, %v1725
      %v1727 = vpop.f32.mrb[0].mxu0
      %v1728 = vpop.f32.mrb[0].mxu0
      %v1729 = vadd.f32 0.0, %v1728
      %v1730 = vpop.f32.mrb[0].mxu0
      %1731 = vmatprep.mubr.bf16.mxu0 %v1568
      %1732 = vmatmul.mubr.bf16.gmra.mrb[0].mxu0 %v1567
      %v1733 = vpop.f32.mrb[0].mxu0
      %v1734 = vadd.f32 0.0, %v1733
      %v1735 = vpop.f32.mrb[0].mxu0
      %v1736 = vpop.f32.mrb[0].mxu0
      %v1737 = vadd.f32 0.0, %v1736
      %v1738 = vpop.f32.mrb[0].mxu0
      %1739 = vmatprep.mubr.bf16.mxu0 %v1570
      %1740 = vmatmul.mubr.bf16.gmra.mrb[0].mxu0 %v1569
      %v1741 = vpop.f32.mrb[0].mxu0
      %v1742 = vadd.f32 0.0, %v1741
      %v1743 = vpop.f32.mrb[0].mxu0
      %v1744 = vpop.f32.mrb[0].mxu0
      %v1745 = vadd.f32 0.0, %v1744
      %v1746 = vpop.f32.mrb[0].mxu0
      %1747 = vdwg.mxu0
      %v1748 = vadd.f32 %v1507, %v1622
      %v1749 = vadd.f32 %v1508, %v1625
      %v1750 = vadd.f32 %v1509, %v1630
      %v1751 = vadd.f32 %v1510, %v1633
      %v1752 = vadd.f32 %v1511, %v1638
      %v1753 = vadd.f32 %v1512, %v1641
      %v1754 = vadd.f32 %v1513, %v1646
      %v1755 = vadd.f32 %v1514, %v1649
      %v1756 = vadd.f32 %v1515, %v1654
      %v1757 = vadd.f32 %v1516, %v1657
      %v1758 = vadd.f32 %v1517, %v1662
      %v1759 = vadd.f32 %v1518, %v1665
      %v1760 = vadd.f32 %v1519, %v1670
      %v1761 = vadd.f32 %v1520, %v1673
      %v1762 = vadd.f32 %v1521, %v1678
      %v1763 = vadd.f32 %v1522, %v1681
      %v1764 = vadd.f32 %v1523, %v1686
      %v1765 = vadd.f32 %v1524, %v1689
      %v1766 = vadd.f32 %v1525, %v1694
      %v1767 = vadd.f32 %v1526, %v1697
      %v1768 = vadd.f32 %v1527, %v1702
      %v1769 = vadd.f32 %v1528, %v1705
      %v1770 = vadd.f32 %v1529, %v1710
      %v1771 = vadd.f32 %v1530, %v1713
      %v1772 = vadd.f32 %v1531, %v1718
      %v1773 = vadd.f32 %v1532, %v1721
      %v1774 = vadd.f32 %v1533, %v1726
      %v1775 = vadd.f32 %v1534, %v1729
      %v1776 = vadd.f32 %v1535, %v1734
      %v1777 = vadd.f32 %v1536, %v1737
      %v1778 = vadd.f32 %v1537, %v1742
      %v1779 = vadd.f32 %v1538, %v1745
      %1780 = vst.msk [vmem:[#allocation3] sm:$0xff] %vm767, %v1748
      %1781 = vst.msk [vmem:[#allocation3 + $0x8] sm:$0xff] %vm767, %v1749
      %1782 = vst.msk [vmem:[#allocation3 + $0x10] sm:$0xff] %vm767, %v1750
      %1783 = vst.msk [vmem:[#allocation3 + $0x18] sm:$0xff] %vm767, %v1751
      %1784 = vst.msk [vmem:[#allocation3 + $0x20] sm:$0xff] %vm767, %v1752
      %1785 = vst.msk [vmem:[#allocation3 + $0x28] sm:$0xff] %vm767, %v1753
      %1786 = vst.msk [vmem:[#allocation3 + $0x30] sm:$0xff] %vm767, %v1754
      %1787 = vst.msk [vmem:[#allocation3 + $0x38] sm:$0xff] %vm767, %v1755
      %1788 = vst.msk [vmem:[#allocation3 + $0x40] sm:$0xff] %vm767, %v1756
      %1789 = vst.msk [vmem:[#allocation3 + $0x48] sm:$0xff] %vm767, %v1757
      %1790 = vst.msk [vmem:[#allocation3 + $0x50] sm:$0xff] %vm767, %v1758
      %1791 = vst.msk [vmem:[#allocation3 + $0x58] sm:$0xff] %vm767, %v1759
      %1792 = vst.msk [vmem:[#allocation3 + $0x60] sm:$0xff] %vm767, %v1760
      %1793 = vst.msk [vmem:[#allocation3 + $0x68] sm:$0xff] %vm767, %v1761
      %1794 = vst.msk [vmem:[#allocation3 + $0x70] sm:$0xff] %vm767, %v1762
      %1795 = vst.msk [vmem:[#allocation3 + $0x78] sm:$0xff] %vm767, %v1763
      %1796 = vst.msk [vmem:[#allocation3 + $0x80] sm:$0xff] %vm767, %v1764
      %1797 = vst.msk [vmem:[#allocation3 + $0x88] sm:$0xff] %vm767, %v1765
      %1798 = vst.msk [vmem:[#allocation3 + $0x90] sm:$0xff] %vm767, %v1766
      %1799 = vst.msk [vmem:[#allocation3 + $0x98] sm:$0xff] %vm767, %v1767
      %1800 = vst.msk [vmem:[#allocation3 + $0xa0] sm:$0xff] %vm767, %v1768
      %1801 = vst.msk [vmem:[#allocation3 + $0xa8] sm:$0xff] %vm767, %v1769
      %1802 = vst.msk [vmem:[#allocation3 + $0xb0] sm:$0xff] %vm767, %v1770
      %1803 = vst.msk [vmem:[#allocation3 + $0xb8] sm:$0xff] %vm767, %v1771
      %1804 = vst.msk [vmem:[#allocation3 + $0xc0] sm:$0xff] %vm767, %v1772
      %1805 = vst.msk [vmem:[#allocation3 + $0xc8] sm:$0xff] %vm767, %v1773
      %1806 = vst.msk [vmem:[#allocation3 + $0xd0] sm:$0xff] %vm767, %v1774
      %1807 = vst.msk [vmem:[#allocation3 + $0xd8] sm:$0xff] %vm767, %v1775
      %1808 = vst.msk [vmem:[#allocation3 + $0xe0] sm:$0xff] %vm767, %v1776
      %1809 = vst.msk [vmem:[#allocation3 + $0xe8] sm:$0xff] %vm767, %v1777
      %1810 = vst.msk [vmem:[#allocation3 + $0xf0] sm:$0xff] %vm767, %v1778
      %1811 = vst.msk [vmem:[#allocation3 + $0xf8] sm:$0xff] %vm767, %v1779
      %p1812 = scmp.eq.s32.totalorder %s22, 1
      // Predicated region
      $region49: #{non_local_b_forward.1} parent=43 // pred_check
        %p1813 = pneg %p1812
      $region50: #{non_local_b_forward.1} parent=43 // pred_check_branch
        %1815 = sbr.rel (%p1813) target = $region52
      $region51: #{non_local_b_forward.1} parent=43 // pred_region
        %v1816 = vld [vmem:[%s275] sm:$0xff]
        %v1817 = vld [vmem:[%s275 + $0x8] sm:$0xff]
        %v1818 = vld [vmem:[%s275 + $0x10] sm:$0xff]
        %v1819 = vld [vmem:[%s275 + $0x18] sm:$0xff]
        %v1820 = vld [vmem:[%s275 + $0x20] sm:$0xff]
        %v1821 = vld [vmem:[%s275 + $0x28] sm:$0xff]
        %v1822 = vld [vmem:[%s275 + $0x30] sm:$0xff]
        %v1823 = vld [vmem:[%s275 + $0x38] sm:$0xff]
        %v1824 = vld [vmem:[%s275 + $0x40] sm:$0xff]
        %v1825 = vld [vmem:[%s275 + $0x48] sm:$0xff]
        %v1826 = vld [vmem:[%s275 + $0x50] sm:$0xff]
        %v1827 = vld [vmem:[%s275 + $0x58] sm:$0xff]
        %v1828 = vld [vmem:[%s275 + $0x60] sm:$0xff]
        %v1829 = vld [vmem:[%s275 + $0x68] sm:$0xff]
        %v1830 = vld [vmem:[%s275 + $0x70] sm:$0xff]
        %v1831 = vld [vmem:[%s275 + $0x78] sm:$0xff]
        %v1832 = vld [vmem:[%s275 + $0x80] sm:$0xff]
        %v1833 = vld [vmem:[%s275 + $0x88] sm:$0xff]
        %v1834 = vld [vmem:[%s275 + $0x90] sm:$0xff]
        %v1835 = vld [vmem:[%s275 + $0x98] sm:$0xff]
        %v1836 = vld [vmem:[%s275 + $0xa0] sm:$0xff]
        %v1837 = vld [vmem:[%s275 + $0xa8] sm:$0xff]
        %v1838 = vld [vmem:[%s275 + $0xb0] sm:$0xff]
        %v1839 = vld [vmem:[%s275 + $0xb8] sm:$0xff]
        %v1840 = vld [vmem:[%s275 + $0xc0] sm:$0xff]
        %v1841 = vld [vmem:[%s275 + $0xc8] sm:$0xff]
        %v1842 = vld [vmem:[%s275 + $0xd0] sm:$0xff]
        %v1843 = vld [vmem:[%s275 + $0xd8] sm:$0xff]
        %v1844 = vld [vmem:[%s275 + $0xe0] sm:$0xff]
        %v1845 = vld [vmem:[%s275 + $0xe8] sm:$0xff]
        %v1846 = vld [vmem:[%s275 + $0xf0] sm:$0xff]
        %v1847 = vld [vmem:[%s275 + $0xf8] sm:$0xff]
        %v1848 = vld [vmem:[#allocation3] sm:$0xff]
        %v1849 = vld [vmem:[#allocation3 + $0x8] sm:$0xff]
        %v1850 = vld [vmem:[#allocation3 + $0x10] sm:$0xff]
        %v1851 = vld [vmem:[#allocation3 + $0x18] sm:$0xff]
        %v1852 = vld [vmem:[#allocation3 + $0x20] sm:$0xff]
        %v1853 = vld [vmem:[#allocation3 + $0x28] sm:$0xff]
        %v1854 = vld [vmem:[#allocation3 + $0x30] sm:$0xff]
        %v1855 = vld [vmem:[#allocation3 + $0x38] sm:$0xff]
        %v1856 = vld [vmem:[#allocation3 + $0x40] sm:$0xff]
        %v1857 = vld [vmem:[#allocation3 + $0x48] sm:$0xff]
        %v1858 = vld [vmem:[#allocation3 + $0x50] sm:$0xff]
        %v1859 = vld [vmem:[#allocation3 + $0x58] sm:$0xff]
        %v1860 = vld [vmem:[#allocation3 + $0x60] sm:$0xff]
        %v1861 = vld [vmem:[#allocation3 + $0x68] sm:$0xff]
        %v1862 = vld [vmem:[#allocation3 + $0x70] sm:$0xff]
        %v1863 = vld [vmem:[#allocation3 + $0x78] sm:$0xff]
        %v1864 = vld [vmem:[#allocation3 + $0x80] sm:$0xff]
        %v1865 = vld [vmem:[#allocation3 + $0x88] sm:$0xff]
        %v1866 = vld [vmem:[#allocation3 + $0x90] sm:$0xff]
        %v1867 = vld [vmem:[#allocation3 + $0x98] sm:$0xff]
        %v1868 = vld [vmem:[#allocation3 + $0xa0] sm:$0xff]
        %v1869 = vld [vmem:[#allocation3 + $0xa8] sm:$0xff]
        %v1870 = vld [vmem:[#allocation3 + $0xb0] sm:$0xff]
        %v1871 = vld [vmem:[#allocation3 + $0xb8] sm:$0xff]
        %v1872 = vld [vmem:[#allocation3 + $0xc0] sm:$0xff]
        %v1873 = vld [vmem:[#allocation3 + $0xc8] sm:$0xff]
        %v1874 = vld [vmem:[#allocation3 + $0xd0] sm:$0xff]
        %v1875 = vld [vmem:[#allocation3 + $0xd8] sm:$0xff]
        %v1876 = vld [vmem:[#allocation3 + $0xe0] sm:$0xff]
        %v1877 = vld [vmem:[#allocation3 + $0xe8] sm:$0xff]
        %v1878 = vld [vmem:[#allocation3 + $0xf0] sm:$0xff]
        %v1879 = vld [vmem:[#allocation3 + $0xf8] sm:$0xff]
        %v1880 = vadd.f32 %v1816, %v1848
        %v1881 = vadd.f32 %v1817, %v1849
        %v1882 = vadd.f32 %v1818, %v1850
        %v1883 = vadd.f32 %v1819, %v1851
        %v1884 = vadd.f32 %v1820, %v1852
        %v1885 = vadd.f32 %v1821, %v1853
        %v1886 = vadd.f32 %v1822, %v1854
        %v1887 = vadd.f32 %v1823, %v1855
        %v1888 = vadd.f32 %v1824, %v1856
        %v1889 = vadd.f32 %v1825, %v1857
        %v1890 = vadd.f32 %v1826, %v1858
        %v1891 = vadd.f32 %v1827, %v1859
        %v1892 = vadd.f32 %v1828, %v1860
        %v1893 = vadd.f32 %v1829, %v1861
        %v1894 = vadd.f32 %v1830, %v1862
        %v1895 = vadd.f32 %v1831, %v1863
        %v1896 = vadd.f32 %v1832, %v1864
        %v1897 = vadd.f32 %v1833, %v1865
        %v1898 = vadd.f32 %v1834, %v1866
        %v1899 = vadd.f32 %v1835, %v1867
        %v1900 = vadd.f32 %v1836, %v1868
        %v1901 = vadd.f32 %v1837, %v1869
        %v1902 = vadd.f32 %v1838, %v1870
        %v1903 = vadd.f32 %v1839, %v1871
        %v1904 = vadd.f32 %v1840, %v1872
        %v1905 = vadd.f32 %v1841, %v1873
        %v1906 = vadd.f32 %v1842, %v1874
        %v1907 = vadd.f32 %v1843, %v1875
        %v1908 = vadd.f32 %v1844, %v1876
        %v1909 = vadd.f32 %v1845, %v1877
        %v1910 = vadd.f32 %v1846, %v1878
        %v1911 = vadd.f32 %v1847, %v1879
        %1912 = vst.msk [vmem:[%s287] sm:$0xff] %vm767, %v1880
        %1913 = vst.msk [vmem:[%s287 + $0x8] sm:$0xff] %vm767, %v1881
        %1914 = vst.msk [vmem:[%s287 + $0x10] sm:$0xff] %vm767, %v1882
        %1915 = vst.msk [vmem:[%s287 + $0x18] sm:$0xff] %vm767, %v1883
        %1916 = vst.msk [vmem:[%s287 + $0x20] sm:$0xff] %vm767, %v1884
        %1917 = vst.msk [vmem:[%s287 + $0x28] sm:$0xff] %vm767, %v1885
        %1918 = vst.msk [vmem:[%s287 + $0x30] sm:$0xff] %vm767, %v1886
        %1919 = vst.msk [vmem:[%s287 + $0x38] sm:$0xff] %vm767, %v1887
        %1920 = vst.msk [vmem:[%s287 + $0x40] sm:$0xff] %vm767, %v1888
        %1921 = vst.msk [vmem:[%s287 + $0x48] sm:$0xff] %vm767, %v1889
        %1922 = vst.msk [vmem:[%s287 + $0x50] sm:$0xff] %vm767, %v1890
        %1923 = vst.msk [vmem:[%s287 + $0x58] sm:$0xff] %vm767, %v1891
        %1924 = vst.msk [vmem:[%s287 + $0x60] sm:$0xff] %vm767, %v1892
        %1925 = vst.msk [vmem:[%s287 + $0x68] sm:$0xff] %vm767, %v1893
        %1926 = vst.msk [vmem:[%s287 + $0x70] sm:$0xff] %vm767, %v1894
        %1927 = vst.msk [vmem:[%s287 + $0x78] sm:$0xff] %vm767, %v1895
        %1928 = vst.msk [vmem:[%s287 + $0x80] sm:$0xff] %vm767, %v1896
        %1929 = vst.msk [vmem:[%s287 + $0x88] sm:$0xff] %vm767, %v1897
        %1930 = vst.msk [vmem:[%s287 + $0x90] sm:$0xff] %vm767, %v1898
        %1931 = vst.msk [vmem:[%s287 + $0x98] sm:$0xff] %vm767, %v1899
        %1932 = vst.msk [vmem:[%s287 + $0xa0] sm:$0xff] %vm767, %v1900
        %1933 = vst.msk [vmem:[%s287 + $0xa8] sm:$0xff] %vm767, %v1901
        %1934 = vst.msk [vmem:[%s287 + $0xb0] sm:$0xff] %vm767, %v1902
        %1935 = vst.msk [vmem:[%s287 + $0xb8] sm:$0xff] %vm767, %v1903
        %1936 = vst.msk [vmem:[%s287 + $0xc0] sm:$0xff] %vm767, %v1904
        %1937 = vst.msk [vmem:[%s287 + $0xc8] sm:$0xff] %vm767, %v1905
        %1938 = vst.msk [vmem:[%s287 + $0xd0] sm:$0xff] %vm767, %v1906
        %1939 = vst.msk [vmem:[%s287 + $0xd8] sm:$0xff] %vm767, %v1907
        %1940 = vst.msk [vmem:[%s287 + $0xe0] sm:$0xff] %vm767, %v1908
        %1941 = vst.msk [vmem:[%s287 + $0xe8] sm:$0xff] %vm767, %v1909
        %1942 = vst.msk [vmem:[%s287 + $0xf0] sm:$0xff] %vm767, %v1910
        %1943 = vst.msk [vmem:[%s287 + $0xf8] sm:$0xff] %vm767, %v1911
      $region52: #{non_local_b_forward.1} parent=43 // pred_fallthru
        _
      %s1944 = smul.u32 32, %s21
      %p1945 = scmp.lt.s32.totalorder %s1944, 63
      %s1946 = scalar_select %p1945, %s1944, 63
      %s1947 = smul.addr %s1946, 8
      %s1948 = scalar_lea.vmem %s6, %s1947
      // Predicated region
      $region53: #{non_local_b_forward.1} parent=43 // pred_check
        %p1949 = pneg %p183
      $region54: #{non_local_b_forward.1} parent=43 // pred_check_branch
        %1951 = sbr.rel (%p1949) target = $region56
      $region55: #{non_local_b_forward.1} parent=43 // pred_region
        %s1952 = smul.u32 32, %s21
      $region56: #{non_local_b_forward.1} parent=43 // pred_fallthru
        _
    $region44: #{non_local_b_forward.1} parent=5 // pred_fallthru
      _
    %p1953 = scmp.le.s32.totalorder 2, %s12
    // Predicated region
    $region57: #{non_local_b_forward.1} parent=5 // pred_check
      %p1954 = pneg %p1953
    $region58: #{non_local_b_forward.1} parent=5 // pred_check_branch
      %1956 = sbr.rel (%p1954) target = $region60
    $region59: #{non_local_b_forward.1} parent=5 // pred_region
      %s1957 = ssub.s32 %s12, 2
      // Predicated region
      $region61: #{non_local_b_forward.1} parent=59 // pred_check
        %p1958 = pneg %p189
      $region62: #{non_local_b_forward.1} parent=59 // pred_check_branch
        %1960 = sbr.rel (%p1958) target = $region64
      $region63: #{non_local_b_forward.1} parent=59 // pred_region
        %s1961 = smul.u32 32, %s23
        %p1962 = scmp.lt.s32.totalorder %s1961, 63
        %s1963 = scalar_select %p1962, %s1961, 63
        %s1964 = smul.addr %s1963, 8
        %s1965 = scalar_lea.vmem %s6, %s1964
      $region64: #{non_local_b_forward.1} parent=59 // pred_fallthru
        _
    $region60: #{non_local_b_forward.1} parent=5 // pred_fallthru
      _
  $region6: #{non_local_b_forward.1} parent=0 // loop_footer
    %s16 = sadd.s32 1, %s12
  $region7: #{non_local_b_forward.1} parent=0 // loop_footer_branch
    %11 = sbr.rel target = $region3
  $region8: #{non_local_b_forward.1} parent=0 // loop_exit
    _

</llo_original>
